<compile_context>
chip_gen: v7x
topology: tpu7x:2x2x1
jax: 0.10.0
libtpu: 0.0.40
codegen_flags: <defaults>
</compile_context>

<pallas_src>
import functools
import math

import jax
import jax.numpy as jnp
import numpy as np
from jax.experimental import pallas as pl
from jax.experimental.pallas import tpu as pltpu


def _cdiv(a: int, b: int) -> int:
    return -(-a // b)


def _round_up(x: int, m: int) -> int:
    return _cdiv(x, m) * m


def _temporal_encoding_kernel(ts_ref, expand_ref, omega_ref, bias_ref, out_ref,
                              *, div_term):
    # ts_ref:     (T, P)     f32   T packed rows, P timestamps per row
    # expand_ref: (P, P*E)   f32   expand[p, c] = 1.0 iff c // E == p (resident)
    # omega_ref:  (1, P*E)   f32   omega tiled P times (resident)
    # bias_ref:   (1, P*E)   f32   bias  tiled P times (resident)
    # out_ref:    (T, P*E)   out_dtype (lane-dense -> unmasked stores)
    #
    # Replicate each timestamp across its E lanes on the otherwise-idle MXU.
    # With 0/1 weights and HIGHEST precision the f32 timestamps pass through
    # bit-exactly, so the phase matches the reference's plain f32 multiply.
    ts_rep = jnp.dot(ts_ref[...], expand_ref[...],
                     precision=jax.lax.Precision.HIGHEST,
                     preferred_element_type=jnp.float32)       # (T, P*E)
    enc = ts_rep * omega_ref[...] + bias_ref[...]
    out_ref[...] = (div_term * jnp.cos(enc)).astype(out_ref.dtype)


def temporal_encoding(timestamp: jax.Array, omega: jax.Array, bias: jax.Array,
                      *, out_dtype=jnp.float32, out_tile_bytes: int = 4 << 20,
                      force_kernel: bool = False) -> jax.Array:
    """Pallas TPU implementation of TemporalEncoding.forward.

    timestamp: (B, L) float
    omega:     (E,)   float
    bias:      (E,)   float
    returns:   (B, L, E) out_dtype (float32 by default, matching PyTorch)
    """
    B, L = timestamp.shape
    E = int(omega.shape[0])
    div_term = math.sqrt(1.0 / E)
    N = B * L

    ts = timestamp.astype(jnp.float32).reshape(-1)        # (N,)
    omega = omega.astype(jnp.float32)
    bias = bias.astype(jnp.float32)

    # Tiny problems: fixed pallas_call / per-step overhead dwarfs the work.
    if not force_kernel and N * E < (1 << 16):
        enc = ts[:, None] * omega[None, :] + bias[None, :]
        return (div_term * jnp.cos(enc)).astype(out_dtype).reshape(B, L, E)

    # ---- choose packing width P ---------------------------------------------
    # G = min timestamps per packed row so the row width G*E is a multiple of
    # 128 (unmasked lane-dense output stores).
    G = 128 // math.gcd(E, 128)
    # Cap P at 128 (lane-dense ts loads need no more) and by the resident
    # expand-matrix footprint (P * P*E * 4 bytes, double buffered).
    max_expand_bytes = 2 << 20
    p_cap = min(128, int(math.isqrt(max_expand_bytes // (4 * E))))
    p_cap = max(G, p_cap // G * G)
    # Prefer the largest P <= p_cap (multiple of G) that divides N: then the
    # packed output is exactly N*E elements and the out[:N] trim copy is
    # skipped entirely.  If no multiple of G divides N, go fully lane dense.
    P = p_cap
    for p in range(p_cap, G - 1, -G):
        if N % p == 0:
            P = p
            break
    lane = P * E

    rows = _cdiv(N, P)
    n_pad = rows * P
    if n_pad != N:
        ts = jnp.pad(ts, (0, n_pad - N))
    ts_p = ts.reshape(rows, P)

    # ---- row tiling -----------------------------------------------------------
    out_itemsize = jnp.dtype(out_dtype).itemsize
    sub = max(8, 32 // out_itemsize)        # sublane multiple: 8 f32 / 16 bf16
    # ~out_tile_bytes per pipeline slot, counting the output tile plus the
    # (lane-padded) timestamp tile; BlockSpec double-buffers both.
    row_bytes = lane * out_itemsize + _round_up(P, 128) * 4
    target_rows = max(sub, (out_tile_bytes // row_bytes) // sub * sub)
    if rows > target_rows:
        tile_rows = target_rows
    elif rows >= 2 * sub:
        # Force >= 2 grid steps so the "parallel" axis can shard across both
        # TensorCores on v7x (no-op on single-TC v5e/v6e).
        tile_rows = _round_up(_cdiv(rows, 2), sub)
    else:
        tile_rows = rows                    # single block == full array dim
    num_tiles = _cdiv(rows, tile_rows)      # ragged last tile: Pallas masks it

    omega_t = jnp.tile(omega, P).reshape(1, lane)
    bias_t = jnp.tile(bias, P).reshape(1, lane)
    expand = jnp.asarray(
        (np.arange(lane) // E == np.arange(P)[:, None]).astype(np.float32))

    kernel = functools.partial(_temporal_encoding_kernel, div_term=div_term)
    out2d = pl.pallas_call(
        kernel,
        out_shape=jax.ShapeDtypeStruct((rows, lane), out_dtype),
        grid=(num_tiles,),
        in_specs=[
            pl.BlockSpec((tile_rows, P), lambda i: (i, 0)),
            pl.BlockSpec((P, lane), lambda i: (0, 0)),
            pl.BlockSpec((1, lane), lambda i: (0, 0)),
            pl.BlockSpec((1, lane), lambda i: (0, 0)),
        ],
        out_specs=pl.BlockSpec((tile_rows, lane), lambda i: (i, 0)),
        compiler_params=pltpu.CompilerParams(
            dimension_semantics=("parallel",),
            vmem_limit_bytes=32 * 1024 * 1024,
        ),
    )(ts_p, expand, omega_t, bias_t)

    # (rows, P*E) is the same row-major memory as (n_pad, E).
    out = out2d.reshape(n_pad, E)
    if n_pad != N:                          # only when no multiple of G divides N
        out = out[:N]
    return out.reshape(B, L, E)


if __name__ == "__main__":
    # Shapes consistent with the module's forward: batch=2, seq=8, embed=32.
    B, L, E = 2, 8, 32

    # Deterministic parameter init, matching the PyTorch __init__:
    #   omega = 1 / 10**linspace(0, 9, E), bias = zeros(E)
    omega = jnp.asarray(1.0 / 10.0 ** np.linspace(0.0, 9.0, E), dtype=jnp.float32)
    bias = jnp.zeros((E,), dtype=jnp.float32)
    div_term = math.sqrt(1.0 / E)

    def reference(ts):
        return div_term * jnp.cos(
            ts[:, :, None] * omega.reshape(1, 1, E) + bias.reshape(1, 1, E))

    key = jax.random.PRNGKey(0)

    # Primary check at the module's toy shape (force_kernel=True so the Pallas
    # path is exercised even below the tiny-problem fallback threshold).
    timestamp = jax.random.uniform(key, (B, L), dtype=jnp.float32) * 1000.0
    out = jax.block_until_ready(
        temporal_encoding(timestamp, omega, bias, force_kernel=True))
    np.testing.assert_allclose(np.asarray(out), np.asarray(reference(timestamp)),
                               rtol=1e-5, atol=1e-5)

    # Secondary checks: multi-tile grid + ragged final block (no trim), and the
    # padded + trimmed path (N not divisible by G).
    for (b2, l2) in [(8, 300), (2, 501)]:
        k2 = jax.random.fold_in(key, b2 * 10000 + l2)
        ts2 = jax.random.uniform(k2, (b2, l2), dtype=jnp.float32) * 1000.0
        out2 = jax.block_until_ready(
            temporal_encoding(ts2, omega, bias, force_kernel=True))
        np.testing.assert_allclose(np.asarray(out2), np.asarray(reference(ts2)),
                                   rtol=1e-5, atol=1e-5)

    print("KERNEL_OK")
</pallas_src>

<mosaic_0001>
module attributes {stable_mosaic.version = 11 : i64} {
  func.func @_temporal_encoding_kernel(%arg0: i32, %arg1: memref<1x16xf32, #tpu.memory_space<vmem>>, %arg2: memref<16x512xf32, #tpu.memory_space<vmem>>, %arg3: memref<1x512xf32, #tpu.memory_space<vmem>>, %arg4: memref<1x512xf32, #tpu.memory_space<vmem>>, %arg5: memref<1x512xf32, #tpu.memory_space<vmem>>) attributes {dimension_semantics = [#tpu.dimension_semantics<parallel>], iteration_bounds = array<i64: 1>, scalar_prefetch = 0 : i64, scratch_operands = 0 : i64, tpu.core_type = #tpu.core_type<tc>, window_params = [{transform_indices = @transform_0, window_bounds = array<i64: 1, 16>}, {pipeline_mode = #tpu.pipeline_mode<synchronous>, transform_indices = @transform_1, window_bounds = array<i64: 16, 512>}, {pipeline_mode = #tpu.pipeline_mode<synchronous>, transform_indices = @transform_2, window_bounds = array<i64: 1, 512>}, {pipeline_mode = #tpu.pipeline_mode<synchronous>, transform_indices = @transform_3, window_bounds = array<i64: 1, 512>}, {transform_indices = @transform_4, window_bounds = array<i64: 1, 512>}]} {
    %c0 = arith.constant 0 : index
    %c0_0 = arith.constant 0 : index
    %0 = vector.load %arg1[%c0, %c0_0] : memref<1x16xf32, #tpu.memory_space<vmem>>, vector<1x16xf32>
    %c0_1 = arith.constant 0 : index
    %c0_2 = arith.constant 0 : index
    %1 = vector.load %arg2[%c0_1, %c0_2] : memref<16x512xf32, #tpu.memory_space<vmem>>, vector<16x512xf32>
    %cst = arith.constant dense<0.000000e+00> : vector<1x512xf32>
    %2 = tpu.matmul %0, %1, %cst {dimension_numbers = #tpu.dot_dimension_numbers<[1], [0], [0], [1], [0, 0, 1, 1], [], []>, precision = #tpu.contract_precision<fp32>} : vector<1x16xf32>, vector<16x512xf32>, vector<1x512xf32> -> vector<1x512xf32>
    %c0_3 = arith.constant 0 : index
    %c0_4 = arith.constant 0 : index
    %3 = vector.load %arg3[%c0_3, %c0_4] : memref<1x512xf32, #tpu.memory_space<vmem>>, vector<1x512xf32>
    %4 = arith.mulf %2, %3 : vector<1x512xf32>
    %c0_5 = arith.constant 0 : index
    %c0_6 = arith.constant 0 : index
    %5 = vector.load %arg4[%c0_5, %c0_6] : memref<1x512xf32, #tpu.memory_space<vmem>>, vector<1x512xf32>
    %6 = arith.addf %4, %5 : vector<1x512xf32>
    %7 = math.cos %6 : vector<1x512xf32>
    %cst_7 = arith.constant 0.176776692 : f32
    %8 = vector.broadcast %cst_7 : f32 to vector<1x512xf32>
    %9 = arith.mulf %8, %7 : vector<1x512xf32>
    %c0_8 = arith.constant 0 : index
    %c0_9 = arith.constant 0 : index
    %10 = vector.load %arg5[%c0_8, %c0_9] : memref<1x512xf32, #tpu.memory_space<vmem>>, vector<1x512xf32>
    tpu.vector_store %arg5[%c0_8, %c0_9], %9 {strides = array<i32>} : memref<1x512xf32, #tpu.memory_space<vmem>>, vector<1x512xf32>,
    return
  }
  func.func @transform_0(%arg0: i32) -> (i32, i32) {
    %c0_i32 = arith.constant 0 : i32
    %c0_i32_0 = arith.constant 0 : i32
    return %arg0, %c0_i32 : i32, i32
  }
  func.func @transform_1(%arg0: i32) -> (i32, i32) {
    %c0_i32 = arith.constant 0 : i32
    %c0_i32_0 = arith.constant 0 : i32
    %c0_i32_1 = arith.constant 0 : i32
    return %c0_i32, %c0_i32_0 : i32, i32
  }
  func.func @transform_2(%arg0: i32) -> (i32, i32) {
    %c0_i32 = arith.constant 0 : i32
    %c0_i32_0 = arith.constant 0 : i32
    %c0_i32_1 = arith.constant 0 : i32
    return %c0_i32, %c0_i32_0 : i32, i32
  }
  func.func @transform_3(%arg0: i32) -> (i32, i32) {
    %c0_i32 = arith.constant 0 : i32
    %c0_i32_0 = arith.constant 0 : i32
    %c0_i32_1 = arith.constant 0 : i32
    return %c0_i32, %c0_i32_0 : i32, i32
  }
  func.func @transform_4(%arg0: i32) -> (i32, i32) {
    %c0_i32 = arith.constant 0 : i32
    %c0_i32_0 = arith.constant 0 : i32
    return %arg0, %c0_i32 : i32, i32
  }
}

</mosaic_0001>

<llo_original>
// kernel: tpu_custom_call.1
$region0: #{tpu_custom_call.1}
  #allocation0 [shape = 'u32[]', space=smem, size = 0x4, offset = 0x4, fixed_abs, tag = 'smem constant byte address 0x4 - core index']
  #allocation1 [shape = 'u32[144,128]{1,0:T(1,128)}', space=vmem, size = 0x12000, scoped, tag = 'internal scratch']
  %s0 = inlined_call_operand.hbm [shape: f32[1,16], index: 0, kind: input, shape index: {}]
  %s1 = inlined_call_operand.hbm [shape: f32[16,512], index: 1, kind: input, shape index: {}]
  %s2 = inlined_call_operand.vmem [shape: f32[1,512], index: 2, kind: input, shape index: {}]
  %s3 = inlined_call_operand.vmem [shape: f32[1,512], index: 3, kind: input, shape index: {}]
  %s4 = inlined_call_operand.hbm [shape: f32[1,512], index: 4, kind: output, shape index: {}]
  %s5 = sld [smem:[#allocation0]]
  $region34: #{tpu_custom_call.1} parent=0
    _
  %s7 = ssub.s32 1, %s5
  %s8 = scalar_select 0, %s7, %s5
  $region1: #{tpu_custom_call.1} parent=0
    #allocation2 [shape = 'u8[512]{0}', space=vmem, size = 0x400, scoped, tag = 'input window, operand 0, single buffered']
    #allocation3 [shape = 's32[1]{0}', space=sflag, size = 0x4, scoped, tag = 'scoped memory for tpu_custom_call.1']
    #allocation4 [shape = 's32[1]{0}', space=sflag, size = 0x4, scoped, tag = 'scoped memory for tpu_custom_call.1']
    #allocation5 [shape = 'u8[32768]{0}', space=vmem, size = 0x8000, scoped, tag = 'input window, operand 1, single buffered']
    #allocation6 [shape = 's32[1]{0}', space=sflag, size = 0x4, scoped, tag = 'scoped memory for tpu_custom_call.1']
    #allocation7 [shape = 'u8[2048]{0}', space=vmem, size = 0x800, scoped, tag = 'output window, operand 0, single buffered']
    %9 = vsyncpa [#allocation3], 0
    %10 = vsyncpa [#allocation6], 0
    %11 = vsyncpa [#allocation4], 0
    // Predicated region
    $region2: #{tpu_custom_call.1} parent=1 // pred_check
      _
    $region3: #{tpu_custom_call.1} parent=1 // pred_check_branch
      %13 = sbr.rel (0) target = $region5
    $region4: #{tpu_custom_call.1} parent=1 // pred_region
      %s15 = ssub.s32 16, 16
      %16 = vsyncadd [#allocation3], %s15
      %s18 = sshll.u32 [#allocation2], 4
      %s19 = int_to_ptr.vmem [resolvable:$true] %s18
      %21 = dma.hbm_to_vmem [thread:$0]  %s0, 16, %s19, [#allocation3]
    $region5: #{tpu_custom_call.1} parent=1 // pred_fallthru
      _
    // Predicated region
    $region6: #{tpu_custom_call.1} parent=1 // pred_check
      _
    $region7: #{tpu_custom_call.1} parent=1 // pred_check_branch
      %23 = sbr.rel (0) target = $region9
    $region8: #{tpu_custom_call.1} parent=1 // pred_region
      %s25 = ssub.s32 1024, 1024
      %26 = vsyncadd [#allocation6], %s25
      %s27 = sshll.u32 [#allocation5], 4
      %s28 = int_to_ptr.vmem [resolvable:$true] %s27
      %33 = dma.hbm_to_vmem [thread:$0]  %s1, 1024, %s28, [#allocation6], 512, 512, 32
    $region9: #{tpu_custom_call.1} parent=1 // pred_fallthru
      _
    // Predicated region
    $region10: #{tpu_custom_call.1} parent=1 // pred_check
      _
    $region11: #{tpu_custom_call.1} parent=1 // pred_check_branch
      %35 = sbr.rel (0) target = $region13
    $region12: #{tpu_custom_call.1} parent=1 // pred_region
      _
    $region13: #{tpu_custom_call.1} parent=1 // pred_fallthru
      _
    // Predicated region
    $region14: #{tpu_custom_call.1} parent=1 // pred_check
      _
    $region15: #{tpu_custom_call.1} parent=1 // pred_check_branch
      %37 = sbr.rel (0) target = $region17
    $region16: #{tpu_custom_call.1} parent=1 // pred_region
      _
    $region17: #{tpu_custom_call.1} parent=1 // pred_fallthru
      _
    // Predicated region
    $region18: #{tpu_custom_call.1} parent=1 // pred_check
      _
    $region19: #{tpu_custom_call.1} parent=1 // pred_check_branch
      %39 = sbr.rel (0) target = $region21
    $region20: #{tpu_custom_call.1} parent=1 // pred_region
      %40 = dma.done [#allocation3], 16
    $region21: #{tpu_custom_call.1} parent=1 // pred_fallthru
      _
    // Predicated region
    $region22: #{tpu_custom_call.1} parent=1 // pred_check
      _
    $region23: #{tpu_custom_call.1} parent=1 // pred_check_branch
      %42 = sbr.rel (0) target = $region25
    $region24: #{tpu_custom_call.1} parent=1 // pred_region
      %43 = dma.done [#allocation6], 1024
    $region25: #{tpu_custom_call.1} parent=1 // pred_fallthru
      _
    %v44 = vld [vmem:[#allocation2] sm:$0x1]
    %v45 = vld [vmem:[#allocation5] sm:$0xff]
    %v46 = vld [vmem:[#allocation5 + $0x8] sm:$0xff]
    %v47 = vld [vmem:[#allocation5 + $0x10] sm:$0xff]
    %v48 = vld [vmem:[#allocation5 + $0x18] sm:$0xff]
    %v49 = vld [vmem:[#allocation5 + $0x20] sm:$0xff]
    %v50 = vld [vmem:[#allocation5 + $0x28] sm:$0xff]
    %v51 = vld [vmem:[#allocation5 + $0x30] sm:$0xff]
    %v52 = vld [vmem:[#allocation5 + $0x38] sm:$0xff]
    %vm53 = vcmask 130048
    %v55 = vsel %vm53, %v44, 0
    %v57 = vand.u32 %v46, 4294901760
    %58 = vmatprep.subr.mxu0 %v57
    %v59 = vand.u32 %v45, 4294901760
    %60 = vmatpush1.msra.mxu0 %v59
    %v61 = vand.u32 %v50, 4294901760
    %62 = vmatprep.subr.mxu0 %v61
    %v63 = vand.u32 %v49, 4294901760
    %64 = vmatpush1.msra.mxu0 %v63
    %65 = vmatprep.subr.mxu0 0.0
    %66 = vmatpush1.msra.mxu0 0.0
    %67 = vmatprep.subr.mxu0 0.0
    %68 = vmatpush1.msra.mxu0 0.0
    %69 = vmatprep.subr.mxu0 0.0
    %70 = vmatpush1.msra.mxu0 0.0
    %71 = vmatprep.subr.mxu0 0.0
    %72 = vmatpush1.msra.mxu0 0.0
    %73 = vmatprep.subr.mxu0 0.0
    %74 = vmatpush1.msra.mxu0 0.0
    %75 = vmatprep.subr.mxu0 0.0
    %76 = vmatpush1.msra.mxu0 0.0
    %77 = vmatprep.subr.mxu0 0.0
    %78 = vmatpush1.msra.mxu0 0.0
    %79 = vmatprep.subr.mxu0 0.0
    %80 = vmatpush1.msra.mxu0 0.0
    %81 = vmatprep.subr.mxu0 0.0
    %82 = vmatpush1.msra.mxu0 0.0
    %83 = vmatprep.subr.mxu0 0.0
    %84 = vmatpush1.msra.mxu0 0.0
    %85 = vmatprep.subr.mxu0 0.0
    %86 = vmatpush1.msra.mxu0 0.0
    %87 = vmatprep.subr.mxu0 0.0
    %88 = vmatpush1.msra.mxu0 0.0
    %89 = vmatprep.subr.mxu0 0.0
    %90 = vmatpush1.msra.mxu0 0.0
    %91 = vmatprep.subr.mxu0 0.0
    %92 = vmatpush1.msra.mxu0 0.0
    %93 = vmatprep.subr.mxu0 0.0
    %94 = vmatpush1.msra.mxu0 0.0
    %95 = vmatprep.subr.mxu0 0.0
    %96 = vmatpush1.msra.mxu0 0.0
    %97 = vmatprep.subr.mxu0 0.0
    %98 = vmatpush1.msra.mxu0 0.0
    %99 = vmatprep.subr.mxu0 0.0
    %100 = vmatpush1.msra.mxu0 0.0
    %101 = vmatprep.subr.mxu0 0.0
    %102 = vmatpush1.msra.mxu0 0.0
    %103 = vmatprep.subr.mxu0 0.0
    %104 = vmatpush1.msra.mxu0 0.0
    %105 = vmatprep.subr.mxu0 0.0
    %106 = vmatpush1.msra.mxu0 0.0
    %107 = vmatprep.subr.mxu0 0.0
    %108 = vmatpush1.msra.mxu0 0.0
    %109 = vmatprep.subr.mxu0 0.0
    %110 = vmatpush1.msra.mxu0 0.0
    %111 = vmatprep.subr.mxu0 0.0
    %112 = vmatpush1.msra.mxu0 0.0
    %113 = vmatprep.subr.mxu0 0.0
    %114 = vmatpush1.msra.mxu0 0.0
    %115 = vmatprep.subr.mxu0 0.0
    %116 = vmatpush1.msra.mxu0 0.0
    %117 = vmatprep.subr.mxu0 0.0
    %118 = vmatpush1.msra.mxu0 0.0
    %119 = vmatprep.subr.mxu0 0.0
    %120 = vmatpush1.msra.mxu0 0.0
    %121 = vmatprep.subr.mxu0 0.0
    %122 = vmatpush1.msra.mxu0 0.0
    %123 = vmatprep.subr.mxu0 0.0
    %124 = vmatpush1.msra.mxu0 0.0
    %125 = vmatprep.mubr.f32.mxu0 0.0
    %v126 = vand.u32 %v55, 4294901760
    %v127 = vsub.f32 %v55, %v126
    %v128 = vand.u32 %v127, 4294901760
    %v129 = vsub.f32 %v127, %v128
    %v130 = vand.u32 %v129, 4294901760
    %131 = vmatmul.mubr.f32.gmra.mrb[0].mxu0 %v130
    %v132 = vpop.f32.mrb[0].mxu0
    %v133 = vadd.f32 0.0, %v132
    %v134 = vpop.f32.mrb[0].mxu0
    %v135 = vadd.f32 0.0, %v134
    %136 = vdwg.mxu0
    %v137 = vand.u32 %v46, 4294901760
    %v138 = vsub.f32 %v46, %v137
    %v139 = vand.u32 %v138, 4294901760
    %v140 = vsub.f32 %v138, %v139
    %v141 = vand.u32 %v140, 4294901760
    %142 = vmatprep.subr.mxu0 %v141
    %v143 = vand.u32 %v45, 4294901760
    %v144 = vsub.f32 %v45, %v143
    %v145 = vand.u32 %v144, 4294901760
    %v146 = vsub.f32 %v144, %v145
    %v147 = vand.u32 %v146, 4294901760
    %148 = vmatpush1.msra.mxu0 %v147
    %v149 = vand.u32 %v50, 4294901760
    %v150 = vsub.f32 %v50, %v149
    %v151 = vand.u32 %v150, 4294901760
    %v152 = vsub.f32 %v150, %v151
    %v153 = vand.u32 %v152, 4294901760
    %154 = vmatprep.subr.mxu0 %v153
    %v155 = vand.u32 %v49, 4294901760
    %v156 = vsub.f32 %v49, %v155
    %v157 = vand.u32 %v156, 4294901760
    %v158 = vsub.f32 %v156, %v157
    %v159 = vand.u32 %v158, 4294901760
    %160 = vmatpush1.msra.mxu0 %v159
    %161 = vmatprep.subr.mxu0 0.0
    %162 = vmatpush1.msra.mxu0 0.0
    %163 = vmatprep.subr.mxu0 0.0
    %164 = vmatpush1.msra.mxu0 0.0
    %165 = vmatprep.subr.mxu0 0.0
    %166 = vmatpush1.msra.mxu0 0.0
    %167 = vmatprep.subr.mxu0 0.0
    %168 = vmatpush1.msra.mxu0 0.0
    %169 = vmatprep.subr.mxu0 0.0
    %170 = vmatpush1.msra.mxu0 0.0
    %171 = vmatprep.subr.mxu0 0.0
    %172 = vmatpush1.msra.mxu0 0.0
    %173 = vmatprep.subr.mxu0 0.0
    %174 = vmatpush1.msra.mxu0 0.0
    %175 = vmatprep.subr.mxu0 0.0
    %176 = vmatpush1.msra.mxu0 0.0
    %177 = vmatprep.subr.mxu0 0.0
    %178 = vmatpush1.msra.mxu0 0.0
    %179 = vmatprep.subr.mxu0 0.0
    %180 = vmatpush1.msra.mxu0 0.0
    %181 = vmatprep.subr.mxu0 0.0
    %182 = vmatpush1.msra.mxu0 0.0
    %183 = vmatprep.subr.mxu0 0.0
    %184 = vmatpush1.msra.mxu0 0.0
    %185 = vmatprep.subr.mxu0 0.0
    %186 = vmatpush1.msra.mxu0 0.0
    %187 = vmatprep.subr.mxu0 0.0
    %188 = vmatpush1.msra.mxu0 0.0
    %189 = vmatprep.subr.mxu0 0.0
    %190 = vmatpush1.msra.mxu0 0.0
    %191 = vmatprep.subr.mxu0 0.0
    %192 = vmatpush1.msra.mxu0 0.0
    %193 = vmatprep.subr.mxu0 0.0
    %194 = vmatpush1.msra.mxu0 0.0
    %195 = vmatprep.subr.mxu0 0.0
    %196 = vmatpush1.msra.mxu0 0.0
    %197 = vmatprep.subr.mxu0 0.0
    %198 = vmatpush1.msra.mxu0 0.0
    %199 = vmatprep.subr.mxu0 0.0
    %200 = vmatpush1.msra.mxu0 0.0
    %201 = vmatprep.subr.mxu0 0.0
    %202 = vmatpush1.msra.mxu0 0.0
    %203 = vmatprep.subr.mxu0 0.0
    %204 = vmatpush1.msra.mxu0 0.0
    %205 = vmatprep.subr.mxu0 0.0
    %206 = vmatpush1.msra.mxu0 0.0
    %207 = vmatprep.subr.mxu0 0.0
    %208 = vmatpush1.msra.mxu0 0.0
    %209 = vmatprep.subr.mxu0 0.0
    %210 = vmatpush1.msra.mxu0 0.0
    %211 = vmatprep.subr.mxu0 0.0
    %212 = vmatpush1.msra.mxu0 0.0
    %213 = vmatprep.subr.mxu0 0.0
    %214 = vmatpush1.msra.mxu0 0.0
    %215 = vmatprep.subr.mxu0 0.0
    %216 = vmatpush1.msra.mxu0 0.0
    %217 = vmatprep.subr.mxu0 0.0
    %218 = vmatpush1.msra.mxu0 0.0
    %219 = vmatprep.subr.mxu0 0.0
    %220 = vmatpush1.msra.mxu0 0.0
    %221 = vmatprep.mubr.f32.mxu0 0.0
    %v222 = vand.u32 %v55, 4294901760
    %223 = vmatmul.mubr.f32.gmra.mrb[0].mxu0 %v222
    %v224 = vpop.f32.mrb[0].mxu0
    %v225 = vadd.f32 %v133, %v224
    %v226 = vpop.f32.mrb[0].mxu0
    %v227 = vadd.f32 %v135, %v226
    %228 = vdwg.mxu0
    %v229 = vand.u32 %v46, 4294901760
    %v230 = vsub.f32 %v46, %v229
    %231 = vmatprep.subr.mxu0 %v230
    %v232 = vand.u32 %v45, 4294901760
    %v233 = vsub.f32 %v45, %v232
    %234 = vmatpush1.msra.mxu0 %v233
    %v235 = vand.u32 %v50, 4294901760
    %v236 = vsub.f32 %v50, %v235
    %237 = vmatprep.subr.mxu0 %v236
    %v238 = vand.u32 %v49, 4294901760
    %v239 = vsub.f32 %v49, %v238
    %240 = vmatpush1.msra.mxu0 %v239
    %241 = vmatprep.subr.mxu0 0.0
    %242 = vmatpush1.msra.mxu0 0.0
    %243 = vmatprep.subr.mxu0 0.0
    %244 = vmatpush1.msra.mxu0 0.0
    %245 = vmatprep.subr.mxu0 0.0
    %246 = vmatpush1.msra.mxu0 0.0
    %247 = vmatprep.subr.mxu0 0.0
    %248 = vmatpush1.msra.mxu0 0.0
    %249 = vmatprep.subr.mxu0 0.0
    %250 = vmatpush1.msra.mxu0 0.0
    %251 = vmatprep.subr.mxu0 0.0
    %252 = vmatpush1.msra.mxu0 0.0
    %253 = vmatprep.subr.mxu0 0.0
    %254 = vmatpush1.msra.mxu0 0.0
    %255 = vmatprep.subr.mxu0 0.0
    %256 = vmatpush1.msra.mxu0 0.0
    %257 = vmatprep.subr.mxu0 0.0
    %258 = vmatpush1.msra.mxu0 0.0
    %259 = vmatprep.subr.mxu0 0.0
    %260 = vmatpush1.msra.mxu0 0.0
    %261 = vmatprep.subr.mxu0 0.0
    %262 = vmatpush1.msra.mxu0 0.0
    %263 = vmatprep.subr.mxu0 0.0
    %264 = vmatpush1.msra.mxu0 0.0
    %265 = vmatprep.subr.mxu0 0.0
    %266 = vmatpush1.msra.mxu0 0.0
    %267 = vmatprep.subr.mxu0 0.0
    %268 = vmatpush1.msra.mxu0 0.0
    %269 = vmatprep.subr.mxu0 0.0
    %270 = vmatpush1.msra.mxu0 0.0
    %271 = vmatprep.subr.mxu0 0.0
    %272 = vmatpush1.msra.mxu0 0.0
    %273 = vmatprep.subr.mxu0 0.0
    %274 = vmatpush1.msra.mxu0 0.0
    %275 = vmatprep.subr.mxu0 0.0
    %276 = vmatpush1.msra.mxu0 0.0
    %277 = vmatprep.subr.mxu0 0.0
    %278 = vmatpush1.msra.mxu0 0.0
    %279 = vmatprep.subr.mxu0 0.0
    %280 = vmatpush1.msra.mxu0 0.0
    %281 = vmatprep.subr.mxu0 0.0
    %282 = vmatpush1.msra.mxu0 0.0
    %283 = vmatprep.subr.mxu0 0.0
    %284 = vmatpush1.msra.mxu0 0.0
    %285 = vmatprep.subr.mxu0 0.0
    %286 = vmatpush1.msra.mxu0 0.0
    %287 = vmatprep.subr.mxu0 0.0
    %288 = vmatpush1.msra.mxu0 0.0
    %289 = vmatprep.subr.mxu0 0.0
    %290 = vmatpush1.msra.mxu0 0.0
    %291 = vmatprep.subr.mxu0 0.0
    %292 = vmatpush1.msra.mxu0 0.0
    %293 = vmatprep.subr.mxu0 0.0
    %294 = vmatpush1.msra.mxu0 0.0
    %295 = vmatprep.subr.mxu0 0.0
    %296 = vmatpush1.msra.mxu0 0.0
    %297 = vmatprep.subr.mxu0 0.0
    %298 = vmatpush1.msra.mxu0 0.0
    %299 = vmatprep.subr.mxu0 0.0
    %300 = vmatpush1.msra.mxu0 0.0
    %301 = vmatprep.mubr.f32.mxu0 0.0
    %v302 = vand.u32 %v55, 4294901760
    %v303 = vsub.f32 %v55, %v302
    %304 = vmatmul.mubr.f32.gmra.mrb[0].mxu0 %v303
    %v305 = vpop.f32.mrb[0].mxu0
    %v306 = vadd.f32 %v225, %v305
    %v307 = vpop.f32.mrb[0].mxu0
    %v308 = vadd.f32 %v227, %v307
    %309 = vdwg.mxu0
    %v310 = vand.u32 %v46, 4294901760
    %311 = vmatprep.subr.mxu0 %v310
    %v312 = vand.u32 %v45, 4294901760
    %313 = vmatpush1.msra.mxu0 %v312
    %v314 = vand.u32 %v50, 4294901760
    %315 = vmatprep.subr.mxu0 %v314
    %v316 = vand.u32 %v49, 4294901760
    %317 = vmatpush1.msra.mxu0 %v316
    %318 = vmatprep.subr.mxu0 0.0
    %319 = vmatpush1.msra.mxu0 0.0
    %320 = vmatprep.subr.mxu0 0.0
    %321 = vmatpush1.msra.mxu0 0.0
    %322 = vmatprep.subr.mxu0 0.0
    %323 = vmatpush1.msra.mxu0 0.0
    %324 = vmatprep.subr.mxu0 0.0
    %325 = vmatpush1.msra.mxu0 0.0
    %326 = vmatprep.subr.mxu0 0.0
    %327 = vmatpush1.msra.mxu0 0.0
    %328 = vmatprep.subr.mxu0 0.0
    %329 = vmatpush1.msra.mxu0 0.0
    %330 = vmatprep.subr.mxu0 0.0
    %331 = vmatpush1.msra.mxu0 0.0
    %332 = vmatprep.subr.mxu0 0.0
    %333 = vmatpush1.msra.mxu0 0.0
    %334 = vmatprep.subr.mxu0 0.0
    %335 = vmatpush1.msra.mxu0 0.0
    %336 = vmatprep.subr.mxu0 0.0
    %337 = vmatpush1.msra.mxu0 0.0
    %338 = vmatprep.subr.mxu0 0.0
    %339 = vmatpush1.msra.mxu0 0.0
    %340 = vmatprep.subr.mxu0 0.0
    %341 = vmatpush1.msra.mxu0 0.0
    %342 = vmatprep.subr.mxu0 0.0
    %343 = vmatpush1.msra.mxu0 0.0
    %344 = vmatprep.subr.mxu0 0.0
    %345 = vmatpush1.msra.mxu0 0.0
    %346 = vmatprep.subr.mxu0 0.0
    %347 = vmatpush1.msra.mxu0 0.0
    %348 = vmatprep.subr.mxu0 0.0
    %349 = vmatpush1.msra.mxu0 0.0
    %350 = vmatprep.subr.mxu0 0.0
    %351 = vmatpush1.msra.mxu0 0.0
    %352 = vmatprep.subr.mxu0 0.0
    %353 = vmatpush1.msra.mxu0 0.0
    %354 = vmatprep.subr.mxu0 0.0
    %355 = vmatpush1.msra.mxu0 0.0
    %356 = vmatprep.subr.mxu0 0.0
    %357 = vmatpush1.msra.mxu0 0.0
    %358 = vmatprep.subr.mxu0 0.0
    %359 = vmatpush1.msra.mxu0 0.0
    %360 = vmatprep.subr.mxu0 0.0
    %361 = vmatpush1.msra.mxu0 0.0
    %362 = vmatprep.subr.mxu0 0.0
    %363 = vmatpush1.msra.mxu0 0.0
    %364 = vmatprep.subr.mxu0 0.0
    %365 = vmatpush1.msra.mxu0 0.0
    %366 = vmatprep.subr.mxu0 0.0
    %367 = vmatpush1.msra.mxu0 0.0
    %368 = vmatprep.subr.mxu0 0.0
    %369 = vmatpush1.msra.mxu0 0.0
    %370 = vmatprep.subr.mxu0 0.0
    %371 = vmatpush1.msra.mxu0 0.0
    %372 = vmatprep.subr.mxu0 0.0
    %373 = vmatpush1.msra.mxu0 0.0
    %374 = vmatprep.subr.mxu0 0.0
    %375 = vmatpush1.msra.mxu0 0.0
    %376 = vmatprep.subr.mxu0 0.0
    %377 = vmatpush1.msra.mxu0 0.0
    %378 = vmatprep.mubr.f32.mxu0 0.0
    %v379 = vand.u32 %v55, 4294901760
    %v380 = vsub.f32 %v55, %v379
    %v381 = vand.u32 %v380, 4294901760
    %382 = vmatmul.mubr.f32.gmra.mrb[0].mxu0 %v381
    %v383 = vpop.f32.mrb[0].mxu0
    %v384 = vadd.f32 %v306, %v383
    %v385 = vpop.f32.mrb[0].mxu0
    %v386 = vadd.f32 %v308, %v385
    %387 = vdwg.mxu0
    %v388 = vand.u32 %v46, 4294901760
    %v389 = vsub.f32 %v46, %v388
    %v390 = vand.u32 %v389, 4294901760
    %391 = vmatprep.subr.mxu0 %v390
    %v392 = vand.u32 %v45, 4294901760
    %v393 = vsub.f32 %v45, %v392
    %v394 = vand.u32 %v393, 4294901760
    %395 = vmatpush1.msra.mxu0 %v394
    %v396 = vand.u32 %v50, 4294901760
    %v397 = vsub.f32 %v50, %v396
    %v398 = vand.u32 %v397, 4294901760
    %399 = vmatprep.subr.mxu0 %v398
    %v400 = vand.u32 %v49, 4294901760
    %v401 = vsub.f32 %v49, %v400
    %v402 = vand.u32 %v401, 4294901760
    %403 = vmatpush1.msra.mxu0 %v402
    %404 = vmatprep.subr.mxu0 0.0
    %405 = vmatpush1.msra.mxu0 0.0
    %406 = vmatprep.subr.mxu0 0.0
    %407 = vmatpush1.msra.mxu0 0.0
    %408 = vmatprep.subr.mxu0 0.0
    %409 = vmatpush1.msra.mxu0 0.0
    %410 = vmatprep.subr.mxu0 0.0
    %411 = vmatpush1.msra.mxu0 0.0
    %412 = vmatprep.subr.mxu0 0.0
    %413 = vmatpush1.msra.mxu0 0.0
    %414 = vmatprep.subr.mxu0 0.0
    %415 = vmatpush1.msra.mxu0 0.0
    %416 = vmatprep.subr.mxu0 0.0
    %417 = vmatpush1.msra.mxu0 0.0
    %418 = vmatprep.subr.mxu0 0.0
    %419 = vmatpush1.msra.mxu0 0.0
    %420 = vmatprep.subr.mxu0 0.0
    %421 = vmatpush1.msra.mxu0 0.0
    %422 = vmatprep.subr.mxu0 0.0
    %423 = vmatpush1.msra.mxu0 0.0
    %424 = vmatprep.subr.mxu0 0.0
    %425 = vmatpush1.msra.mxu0 0.0
    %426 = vmatprep.subr.mxu0 0.0
    %427 = vmatpush1.msra.mxu0 0.0
    %428 = vmatprep.subr.mxu0 0.0
    %429 = vmatpush1.msra.mxu0 0.0
    %430 = vmatprep.subr.mxu0 0.0
    %431 = vmatpush1.msra.mxu0 0.0
    %432 = vmatprep.subr.mxu0 0.0
    %433 = vmatpush1.msra.mxu0 0.0
    %434 = vmatprep.subr.mxu0 0.0
    %435 = vmatpush1.msra.mxu0 0.0
    %436 = vmatprep.subr.mxu0 0.0
    %437 = vmatpush1.msra.mxu0 0.0
    %438 = vmatprep.subr.mxu0 0.0
    %439 = vmatpush1.msra.mxu0 0.0
    %440 = vmatprep.subr.mxu0 0.0
    %441 = vmatpush1.msra.mxu0 0.0
    %442 = vmatprep.subr.mxu0 0.0
    %443 = vmatpush1.msra.mxu0 0.0
    %444 = vmatprep.subr.mxu0 0.0
    %445 = vmatpush1.msra.mxu0 0.0
    %446 = vmatprep.subr.mxu0 0.0
    %447 = vmatpush1.msra.mxu0 0.0
    %448 = vmatprep.subr.mxu0 0.0
    %449 = vmatpush1.msra.mxu0 0.0
    %450 = vmatprep.subr.mxu0 0.0
    %451 = vmatpush1.msra.mxu0 0.0
    %452 = vmatprep.subr.mxu0 0.0
    %453 = vmatpush1.msra.mxu0 0.0
    %454 = vmatprep.subr.mxu0 0.0
    %455 = vmatpush1.msra.mxu0 0.0
    %456 = vmatprep.subr.mxu0 0.0
    %457 = vmatpush1.msra.mxu0 0.0
    %458 = vmatprep.subr.mxu0 0.0
    %459 = vmatpush1.msra.mxu0 0.0
    %460 = vmatprep.subr.mxu0 0.0
    %461 = vmatpush1.msra.mxu0 0.0
    %462 = vmatprep.subr.mxu0 0.0
    %463 = vmatpush1.msra.mxu0 0.0
    %464 = vmatprep.mubr.f32.mxu0 0.0
    %v465 = vand.u32 %v55, 4294901760
    %466 = vmatmul.mubr.f32.gmra.mrb[0].mxu0 %v465
    %v467 = vpop.f32.mrb[0].mxu0
    %v468 = vadd.f32 %v384, %v467
    %v469 = vpop.f32.mrb[0].mxu0
    %v470 = vadd.f32 %v386, %v469
    %471 = vdwg.mxu0
    %v472 = vand.u32 %v46, 4294901760
    %473 = vmatprep.subr.mxu0 %v472
    %v474 = vand.u32 %v45, 4294901760
    %475 = vmatpush1.msra.mxu0 %v474
    %v476 = vand.u32 %v50, 4294901760
    %477 = vmatprep.subr.mxu0 %v476
    %v478 = vand.u32 %v49, 4294901760
    %479 = vmatpush1.msra.mxu0 %v478
    %480 = vmatprep.subr.mxu0 0.0
    %481 = vmatpush1.msra.mxu0 0.0
    %482 = vmatprep.subr.mxu0 0.0
    %483 = vmatpush1.msra.mxu0 0.0
    %484 = vmatprep.subr.mxu0 0.0
    %485 = vmatpush1.msra.mxu0 0.0
    %486 = vmatprep.subr.mxu0 0.0
    %487 = vmatpush1.msra.mxu0 0.0
    %488 = vmatprep.subr.mxu0 0.0
    %489 = vmatpush1.msra.mxu0 0.0
    %490 = vmatprep.subr.mxu0 0.0
    %491 = vmatpush1.msra.mxu0 0.0
    %492 = vmatprep.subr.mxu0 0.0
    %493 = vmatpush1.msra.mxu0 0.0
    %494 = vmatprep.subr.mxu0 0.0
    %495 = vmatpush1.msra.mxu0 0.0
    %496 = vmatprep.subr.mxu0 0.0
    %497 = vmatpush1.msra.mxu0 0.0
    %498 = vmatprep.subr.mxu0 0.0
    %499 = vmatpush1.msra.mxu0 0.0
    %500 = vmatprep.subr.mxu0 0.0
    %501 = vmatpush1.msra.mxu0 0.0
    %502 = vmatprep.subr.mxu0 0.0
    %503 = vmatpush1.msra.mxu0 0.0
    %504 = vmatprep.subr.mxu0 0.0
    %505 = vmatpush1.msra.mxu0 0.0
    %506 = vmatprep.subr.mxu0 0.0
    %507 = vmatpush1.msra.mxu0 0.0
    %508 = vmatprep.subr.mxu0 0.0
    %509 = vmatpush1.msra.mxu0 0.0
    %510 = vmatprep.subr.mxu0 0.0
    %511 = vmatpush1.msra.mxu0 0.0
    %512 = vmatprep.subr.mxu0 0.0
    %513 = vmatpush1.msra.mxu0 0.0
    %514 = vmatprep.subr.mxu0 0.0
    %515 = vmatpush1.msra.mxu0 0.0
    %516 = vmatprep.subr.mxu0 0.0
    %517 = vmatpush1.msra.mxu0 0.0
    %518 = vmatprep.subr.mxu0 0.0
    %519 = vmatpush1.msra.mxu0 0.0
    %520 = vmatprep.subr.mxu0 0.0
    %521 = vmatpush1.msra.mxu0 0.0
    %522 = vmatprep.subr.mxu0 0.0
    %523 = vmatpush1.msra.mxu0 0.0
    %524 = vmatprep.subr.mxu0 0.0
    %525 = vmatpush1.msra.mxu0 0.0
    %526 = vmatprep.subr.mxu0 0.0
    %527 = vmatpush1.msra.mxu0 0.0
    %528 = vmatprep.subr.mxu0 0.0
    %529 = vmatpush1.msra.mxu0 0.0
    %530 = vmatprep.subr.mxu0 0.0
    %531 = vmatpush1.msra.mxu0 0.0
    %532 = vmatprep.subr.mxu0 0.0
    %533 = vmatpush1.msra.mxu0 0.0
    %534 = vmatprep.subr.mxu0 0.0
    %535 = vmatpush1.msra.mxu0 0.0
    %536 = vmatprep.subr.mxu0 0.0
    %537 = vmatpush1.msra.mxu0 0.0
    %538 = vmatprep.subr.mxu0 0.0
    %539 = vmatpush1.msra.mxu0 0.0
    %540 = vmatprep.mubr.f32.mxu0 0.0
    %v541 = vand.u32 %v55, 4294901760
    %542 = vmatmul.mubr.f32.gmra.mrb[0].mxu0 %v541
    %v543 = vpop.f32.mrb[0].mxu0
    %v544 = vadd.f32 %v468, %v543
    %v545 = vpop.f32.mrb[0].mxu0
    %v546 = vadd.f32 %v470, %v545
    %547 = vdwg.mxu0
    %v548 = vand.u32 %v48, 4294901760
    %549 = vmatprep.subr.mxu0 %v548
    %v550 = vand.u32 %v47, 4294901760
    %551 = vmatpush1.msra.mxu0 %v550
    %v552 = vand.u32 %v52, 4294901760
    %553 = vmatprep.subr.mxu0 %v552
    %v554 = vand.u32 %v51, 4294901760
    %555 = vmatpush1.msra.mxu0 %v554
    %556 = vmatprep.subr.mxu0 0.0
    %557 = vmatpush1.msra.mxu0 0.0
    %558 = vmatprep.subr.mxu0 0.0
    %559 = vmatpush1.msra.mxu0 0.0
    %560 = vmatprep.subr.mxu0 0.0
    %561 = vmatpush1.msra.mxu0 0.0
    %562 = vmatprep.subr.mxu0 0.0
    %563 = vmatpush1.msra.mxu0 0.0
    %564 = vmatprep.subr.mxu0 0.0
    %565 = vmatpush1.msra.mxu0 0.0
    %566 = vmatprep.subr.mxu0 0.0
    %567 = vmatpush1.msra.mxu0 0.0
    %568 = vmatprep.subr.mxu0 0.0
    %569 = vmatpush1.msra.mxu0 0.0
    %570 = vmatprep.subr.mxu0 0.0
    %571 = vmatpush1.msra.mxu0 0.0
    %572 = vmatprep.subr.mxu0 0.0
    %573 = vmatpush1.msra.mxu0 0.0
    %574 = vmatprep.subr.mxu0 0.0
    %575 = vmatpush1.msra.mxu0 0.0
    %576 = vmatprep.subr.mxu0 0.0
    %577 = vmatpush1.msra.mxu0 0.0
    %578 = vmatprep.subr.mxu0 0.0
    %579 = vmatpush1.msra.mxu0 0.0
    %580 = vmatprep.subr.mxu0 0.0
    %581 = vmatpush1.msra.mxu0 0.0
    %582 = vmatprep.subr.mxu0 0.0
    %583 = vmatpush1.msra.mxu0 0.0
    %584 = vmatprep.subr.mxu0 0.0
    %585 = vmatpush1.msra.mxu0 0.0
    %586 = vmatprep.subr.mxu0 0.0
    %587 = vmatpush1.msra.mxu0 0.0
    %588 = vmatprep.subr.mxu0 0.0
    %589 = vmatpush1.msra.mxu0 0.0
    %590 = vmatprep.subr.mxu0 0.0
    %591 = vmatpush1.msra.mxu0 0.0
    %592 = vmatprep.subr.mxu0 0.0
    %593 = vmatpush1.msra.mxu0 0.0
    %594 = vmatprep.subr.mxu0 0.0
    %595 = vmatpush1.msra.mxu0 0.0
    %596 = vmatprep.subr.mxu0 0.0
    %597 = vmatpush1.msra.mxu0 0.0
    %598 = vmatprep.subr.mxu0 0.0
    %599 = vmatpush1.msra.mxu0 0.0
    %600 = vmatprep.subr.mxu0 0.0
    %601 = vmatpush1.msra.mxu0 0.0
    %602 = vmatprep.subr.mxu0 0.0
    %603 = vmatpush1.msra.mxu0 0.0
    %604 = vmatprep.subr.mxu0 0.0
    %605 = vmatpush1.msra.mxu0 0.0
    %606 = vmatprep.subr.mxu0 0.0
    %607 = vmatpush1.msra.mxu0 0.0
    %608 = vmatprep.subr.mxu0 0.0
    %609 = vmatpush1.msra.mxu0 0.0
    %610 = vmatprep.subr.mxu0 0.0
    %611 = vmatpush1.msra.mxu0 0.0
    %612 = vmatprep.subr.mxu0 0.0
    %613 = vmatpush1.msra.mxu0 0.0
    %614 = vmatprep.subr.mxu0 0.0
    %615 = vmatpush1.msra.mxu0 0.0
    %616 = vmatprep.mubr.f32.mxu0 0.0
    %v617 = vand.u32 %v55, 4294901760
    %v618 = vsub.f32 %v55, %v617
    %v619 = vand.u32 %v618, 4294901760
    %v620 = vsub.f32 %v618, %v619
    %v621 = vand.u32 %v620, 4294901760
    %622 = vmatmul.mubr.f32.gmra.mrb[0].mxu0 %v621
    %v623 = vpop.f32.mrb[0].mxu0
    %v624 = vadd.f32 0.0, %v623
    %v625 = vpop.f32.mrb[0].mxu0
    %v626 = vadd.f32 0.0, %v625
    %627 = vdwg.mxu0
    %v628 = vand.u32 %v48, 4294901760
    %v629 = vsub.f32 %v48, %v628
    %v630 = vand.u32 %v629, 4294901760
    %v631 = vsub.f32 %v629, %v630
    %v632 = vand.u32 %v631, 4294901760
    %633 = vmatprep.subr.mxu0 %v632
    %v634 = vand.u32 %v47, 4294901760
    %v635 = vsub.f32 %v47, %v634
    %v636 = vand.u32 %v635, 4294901760
    %v637 = vsub.f32 %v635, %v636
    %v638 = vand.u32 %v637, 4294901760
    %639 = vmatpush1.msra.mxu0 %v638
    %v640 = vand.u32 %v52, 4294901760
    %v641 = vsub.f32 %v52, %v640
    %v642 = vand.u32 %v641, 4294901760
    %v643 = vsub.f32 %v641, %v642
    %v644 = vand.u32 %v643, 4294901760
    %645 = vmatprep.subr.mxu0 %v644
    %v646 = vand.u32 %v51, 4294901760
    %v647 = vsub.f32 %v51, %v646
    %v648 = vand.u32 %v647, 4294901760
    %v649 = vsub.f32 %v647, %v648
    %v650 = vand.u32 %v649, 4294901760
    %651 = vmatpush1.msra.mxu0 %v650
    %652 = vmatprep.subr.mxu0 0.0
    %653 = vmatpush1.msra.mxu0 0.0
    %654 = vmatprep.subr.mxu0 0.0
    %655 = vmatpush1.msra.mxu0 0.0
    %656 = vmatprep.subr.mxu0 0.0
    %657 = vmatpush1.msra.mxu0 0.0
    %658 = vmatprep.subr.mxu0 0.0
    %659 = vmatpush1.msra.mxu0 0.0
    %660 = vmatprep.subr.mxu0 0.0
    %661 = vmatpush1.msra.mxu0 0.0
    %662 = vmatprep.subr.mxu0 0.0
    %663 = vmatpush1.msra.mxu0 0.0
    %664 = vmatprep.subr.mxu0 0.0
    %665 = vmatpush1.msra.mxu0 0.0
    %666 = vmatprep.subr.mxu0 0.0
    %667 = vmatpush1.msra.mxu0 0.0
    %668 = vmatprep.subr.mxu0 0.0
    %669 = vmatpush1.msra.mxu0 0.0
    %670 = vmatprep.subr.mxu0 0.0
    %671 = vmatpush1.msra.mxu0 0.0
    %672 = vmatprep.subr.mxu0 0.0
    %673 = vmatpush1.msra.mxu0 0.0
    %674 = vmatprep.subr.mxu0 0.0
    %675 = vmatpush1.msra.mxu0 0.0
    %676 = vmatprep.subr.mxu0 0.0
    %677 = vmatpush1.msra.mxu0 0.0
    %678 = vmatprep.subr.mxu0 0.0
    %679 = vmatpush1.msra.mxu0 0.0
    %680 = vmatprep.subr.mxu0 0.0
    %681 = vmatpush1.msra.mxu0 0.0
    %682 = vmatprep.subr.mxu0 0.0
    %683 = vmatpush1.msra.mxu0 0.0
    %684 = vmatprep.subr.mxu0 0.0
    %685 = vmatpush1.msra.mxu0 0.0
    %686 = vmatprep.subr.mxu0 0.0
    %687 = vmatpush1.msra.mxu0 0.0
    %688 = vmatprep.subr.mxu0 0.0
    %689 = vmatpush1.msra.mxu0 0.0
    %690 = vmatprep.subr.mxu0 0.0
    %691 = vmatpush1.msra.mxu0 0.0
    %692 = vmatprep.subr.mxu0 0.0
    %693 = vmatpush1.msra.mxu0 0.0
    %694 = vmatprep.subr.mxu0 0.0
    %695 = vmatpush1.msra.mxu0 0.0
    %696 = vmatprep.subr.mxu0 0.0
    %697 = vmatpush1.msra.mxu0 0.0
    %698 = vmatprep.subr.mxu0 0.0
    %699 = vmatpush1.msra.mxu0 0.0
    %700 = vmatprep.subr.mxu0 0.0
    %701 = vmatpush1.msra.mxu0 0.0
    %702 = vmatprep.subr.mxu0 0.0
    %703 = vmatpush1.msra.mxu0 0.0
    %704 = vmatprep.subr.mxu0 0.0
    %705 = vmatpush1.msra.mxu0 0.0
    %706 = vmatprep.subr.mxu0 0.0
    %707 = vmatpush1.msra.mxu0 0.0
    %708 = vmatprep.subr.mxu0 0.0
    %709 = vmatpush1.msra.mxu0 0.0
    %710 = vmatprep.subr.mxu0 0.0
    %711 = vmatpush1.msra.mxu0 0.0
    %712 = vmatprep.mubr.f32.mxu0 0.0
    %v713 = vand.u32 %v55, 4294901760
    %714 = vmatmul.mubr.f32.gmra.mrb[0].mxu0 %v713
    %v715 = vpop.f32.mrb[0].mxu0
    %v716 = vadd.f32 %v624, %v715
    %v717 = vpop.f32.mrb[0].mxu0
    %v718 = vadd.f32 %v626, %v717
    %719 = vdwg.mxu0
    %v720 = vand.u32 %v48, 4294901760
    %v721 = vsub.f32 %v48, %v720
    %722 = vmatprep.subr.mxu0 %v721
    %v723 = vand.u32 %v47, 4294901760
    %v724 = vsub.f32 %v47, %v723
    %725 = vmatpush1.msra.mxu0 %v724
    %v726 = vand.u32 %v52, 4294901760
    %v727 = vsub.f32 %v52, %v726
    %728 = vmatprep.subr.mxu0 %v727
    %v729 = vand.u32 %v51, 4294901760
    %v730 = vsub.f32 %v51, %v729
    %731 = vmatpush1.msra.mxu0 %v730
    %732 = vmatprep.subr.mxu0 0.0
    %733 = vmatpush1.msra.mxu0 0.0
    %734 = vmatprep.subr.mxu0 0.0
    %735 = vmatpush1.msra.mxu0 0.0
    %736 = vmatprep.subr.mxu0 0.0
    %737 = vmatpush1.msra.mxu0 0.0
    %738 = vmatprep.subr.mxu0 0.0
    %739 = vmatpush1.msra.mxu0 0.0
    %740 = vmatprep.subr.mxu0 0.0
    %741 = vmatpush1.msra.mxu0 0.0
    %742 = vmatprep.subr.mxu0 0.0
    %743 = vmatpush1.msra.mxu0 0.0
    %744 = vmatprep.subr.mxu0 0.0
    %745 = vmatpush1.msra.mxu0 0.0
    %746 = vmatprep.subr.mxu0 0.0
    %747 = vmatpush1.msra.mxu0 0.0
    %748 = vmatprep.subr.mxu0 0.0
    %749 = vmatpush1.msra.mxu0 0.0
    %750 = vmatprep.subr.mxu0 0.0
    %751 = vmatpush1.msra.mxu0 0.0
    %752 = vmatprep.subr.mxu0 0.0
    %753 = vmatpush1.msra.mxu0 0.0
    %754 = vmatprep.subr.mxu0 0.0
    %755 = vmatpush1.msra.mxu0 0.0
    %756 = vmatprep.subr.mxu0 0.0
    %757 = vmatpush1.msra.mxu0 0.0
    %758 = vmatprep.subr.mxu0 0.0
    %759 = vmatpush1.msra.mxu0 0.0
    %760 = vmatprep.subr.mxu0 0.0
    %761 = vmatpush1.msra.mxu0 0.0
    %762 = vmatprep.subr.mxu0 0.0
    %763 = vmatpush1.msra.mxu0 0.0
    %764 = vmatprep.subr.mxu0 0.0
    %765 = vmatpush1.msra.mxu0 0.0
    %766 = vmatprep.subr.mxu0 0.0
    %767 = vmatpush1.msra.mxu0 0.0
    %768 = vmatprep.subr.mxu0 0.0
    %769 = vmatpush1.msra.mxu0 0.0
    %770 = vmatprep.subr.mxu0 0.0
    %771 = vmatpush1.msra.mxu0 0.0
    %772 = vmatprep.subr.mxu0 0.0
    %773 = vmatpush1.msra.mxu0 0.0
    %774 = vmatprep.subr.mxu0 0.0
    %775 = vmatpush1.msra.mxu0 0.0
    %776 = vmatprep.subr.mxu0 0.0
    %777 = vmatpush1.msra.mxu0 0.0
    %778 = vmatprep.subr.mxu0 0.0
    %779 = vmatpush1.msra.mxu0 0.0
    %780 = vmatprep.subr.mxu0 0.0
    %781 = vmatpush1.msra.mxu0 0.0
    %782 = vmatprep.subr.mxu0 0.0
    %783 = vmatpush1.msra.mxu0 0.0
    %784 = vmatprep.subr.mxu0 0.0
    %785 = vmatpush1.msra.mxu0 0.0
    %786 = vmatprep.subr.mxu0 0.0
    %787 = vmatpush1.msra.mxu0 0.0
    %788 = vmatprep.subr.mxu0 0.0
    %789 = vmatpush1.msra.mxu0 0.0
    %790 = vmatprep.subr.mxu0 0.0
    %791 = vmatpush1.msra.mxu0 0.0
    %792 = vmatprep.mubr.f32.mxu0 0.0
    %v793 = vand.u32 %v55, 4294901760
    %v794 = vsub.f32 %v55, %v793
    %795 = vmatmul.mubr.f32.gmra.mrb[0].mxu0 %v794
    %v796 = vpop.f32.mrb[0].mxu0
    %v797 = vadd.f32 %v716, %v796
    %v798 = vpop.f32.mrb[0].mxu0
    %v799 = vadd.f32 %v718, %v798
    %800 = vdwg.mxu0
    %v801 = vand.u32 %v48, 4294901760
    %802 = vmatprep.subr.mxu0 %v801
    %v803 = vand.u32 %v47, 4294901760
    %804 = vmatpush1.msra.mxu0 %v803
    %v805 = vand.u32 %v52, 4294901760
    %806 = vmatprep.subr.mxu0 %v805
    %v807 = vand.u32 %v51, 4294901760
    %808 = vmatpush1.msra.mxu0 %v807
    %809 = vmatprep.subr.mxu0 0.0
    %810 = vmatpush1.msra.mxu0 0.0
    %811 = vmatprep.subr.mxu0 0.0
    %812 = vmatpush1.msra.mxu0 0.0
    %813 = vmatprep.subr.mxu0 0.0
    %814 = vmatpush1.msra.mxu0 0.0
    %815 = vmatprep.subr.mxu0 0.0
    %816 = vmatpush1.msra.mxu0 0.0
    %817 = vmatprep.subr.mxu0 0.0
    %818 = vmatpush1.msra.mxu0 0.0
    %819 = vmatprep.subr.mxu0 0.0
    %820 = vmatpush1.msra.mxu0 0.0
    %821 = vmatprep.subr.mxu0 0.0
    %822 = vmatpush1.msra.mxu0 0.0
    %823 = vmatprep.subr.mxu0 0.0
    %824 = vmatpush1.msra.mxu0 0.0
    %825 = vmatprep.subr.mxu0 0.0
    %826 = vmatpush1.msra.mxu0 0.0
    %827 = vmatprep.subr.mxu0 0.0
    %828 = vmatpush1.msra.mxu0 0.0
    %829 = vmatprep.subr.mxu0 0.0
    %830 = vmatpush1.msra.mxu0 0.0
    %831 = vmatprep.subr.mxu0 0.0
    %832 = vmatpush1.msra.mxu0 0.0
    %833 = vmatprep.subr.mxu0 0.0
    %834 = vmatpush1.msra.mxu0 0.0
    %835 = vmatprep.subr.mxu0 0.0
    %836 = vmatpush1.msra.mxu0 0.0
    %837 = vmatprep.subr.mxu0 0.0
    %838 = vmatpush1.msra.mxu0 0.0
    %839 = vmatprep.subr.mxu0 0.0
    %840 = vmatpush1.msra.mxu0 0.0
    %841 = vmatprep.subr.mxu0 0.0
    %842 = vmatpush1.msra.mxu0 0.0
    %843 = vmatprep.subr.mxu0 0.0
    %844 = vmatpush1.msra.mxu0 0.0
    %845 = vmatprep.subr.mxu0 0.0
    %846 = vmatpush1.msra.mxu0 0.0
    %847 = vmatprep.subr.mxu0 0.0
    %848 = vmatpush1.msra.mxu0 0.0
    %849 = vmatprep.subr.mxu0 0.0
    %850 = vmatpush1.msra.mxu0 0.0
    %851 = vmatprep.subr.mxu0 0.0
    %852 = vmatpush1.msra.mxu0 0.0
    %853 = vmatprep.subr.mxu0 0.0
    %854 = vmatpush1.msra.mxu0 0.0
    %855 = vmatprep.subr.mxu0 0.0
    %856 = vmatpush1.msra.mxu0 0.0
    %857 = vmatprep.subr.mxu0 0.0
    %858 = vmatpush1.msra.mxu0 0.0
    %859 = vmatprep.subr.mxu0 0.0
    %860 = vmatpush1.msra.mxu0 0.0
    %861 = vmatprep.subr.mxu0 0.0
    %862 = vmatpush1.msra.mxu0 0.0
    %863 = vmatprep.subr.mxu0 0.0
    %864 = vmatpush1.msra.mxu0 0.0
    %865 = vmatprep.subr.mxu0 0.0
    %866 = vmatpush1.msra.mxu0 0.0
    %867 = vmatprep.subr.mxu0 0.0
    %868 = vmatpush1.msra.mxu0 0.0
    %869 = vmatprep.mubr.f32.mxu0 0.0
    %v870 = vand.u32 %v55, 4294901760
    %v871 = vsub.f32 %v55, %v870
    %v872 = vand.u32 %v871, 4294901760
    %873 = vmatmul.mubr.f32.gmra.mrb[0].mxu0 %v872
    %v874 = vpop.f32.mrb[0].mxu0
    %v875 = vadd.f32 %v797, %v874
    %v876 = vpop.f32.mrb[0].mxu0
    %v877 = vadd.f32 %v799, %v876
    %878 = vdwg.mxu0
    %v879 = vand.u32 %v48, 4294901760
    %v880 = vsub.f32 %v48, %v879
    %v881 = vand.u32 %v880, 4294901760
    %882 = vmatprep.subr.mxu0 %v881
    %v883 = vand.u32 %v47, 4294901760
    %v884 = vsub.f32 %v47, %v883
    %v885 = vand.u32 %v884, 4294901760
    %886 = vmatpush1.msra.mxu0 %v885
    %v887 = vand.u32 %v52, 4294901760
    %v888 = vsub.f32 %v52, %v887
    %v889 = vand.u32 %v888, 4294901760
    %890 = vmatprep.subr.mxu0 %v889
    %v891 = vand.u32 %v51, 4294901760
    %v892 = vsub.f32 %v51, %v891
    %v893 = vand.u32 %v892, 4294901760
    %894 = vmatpush1.msra.mxu0 %v893
    %895 = vmatprep.subr.mxu0 0.0
    %896 = vmatpush1.msra.mxu0 0.0
    %897 = vmatprep.subr.mxu0 0.0
    %898 = vmatpush1.msra.mxu0 0.0
    %899 = vmatprep.subr.mxu0 0.0
    %900 = vmatpush1.msra.mxu0 0.0
    %901 = vmatprep.subr.mxu0 0.0
    %902 = vmatpush1.msra.mxu0 0.0
    %903 = vmatprep.subr.mxu0 0.0
    %904 = vmatpush1.msra.mxu0 0.0
    %905 = vmatprep.subr.mxu0 0.0
    %906 = vmatpush1.msra.mxu0 0.0
    %907 = vmatprep.subr.mxu0 0.0
    %908 = vmatpush1.msra.mxu0 0.0
    %909 = vmatprep.subr.mxu0 0.0
    %910 = vmatpush1.msra.mxu0 0.0
    %911 = vmatprep.subr.mxu0 0.0
    %912 = vmatpush1.msra.mxu0 0.0
    %913 = vmatprep.subr.mxu0 0.0
    %914 = vmatpush1.msra.mxu0 0.0
    %915 = vmatprep.subr.mxu0 0.0
    %916 = vmatpush1.msra.mxu0 0.0
    %917 = vmatprep.subr.mxu0 0.0
    %918 = vmatpush1.msra.mxu0 0.0
    %919 = vmatprep.subr.mxu0 0.0
    %920 = vmatpush1.msra.mxu0 0.0
    %921 = vmatprep.subr.mxu0 0.0
    %922 = vmatpush1.msra.mxu0 0.0
    %923 = vmatprep.subr.mxu0 0.0
    %924 = vmatpush1.msra.mxu0 0.0
    %925 = vmatprep.subr.mxu0 0.0
    %926 = vmatpush1.msra.mxu0 0.0
    %927 = vmatprep.subr.mxu0 0.0
    %928 = vmatpush1.msra.mxu0 0.0
    %929 = vmatprep.subr.mxu0 0.0
    %930 = vmatpush1.msra.mxu0 0.0
    %931 = vmatprep.subr.mxu0 0.0
    %932 = vmatpush1.msra.mxu0 0.0
    %933 = vmatprep.subr.mxu0 0.0
    %934 = vmatpush1.msra.mxu0 0.0
    %935 = vmatprep.subr.mxu0 0.0
    %936 = vmatpush1.msra.mxu0 0.0
    %937 = vmatprep.subr.mxu0 0.0
    %938 = vmatpush1.msra.mxu0 0.0
    %939 = vmatprep.subr.mxu0 0.0
    %940 = vmatpush1.msra.mxu0 0.0
    %941 = vmatprep.subr.mxu0 0.0
    %942 = vmatpush1.msra.mxu0 0.0
    %943 = vmatprep.subr.mxu0 0.0
    %944 = vmatpush1.msra.mxu0 0.0
    %945 = vmatprep.subr.mxu0 0.0
    %946 = vmatpush1.msra.mxu0 0.0
    %947 = vmatprep.subr.mxu0 0.0
    %948 = vmatpush1.msra.mxu0 0.0
    %949 = vmatprep.subr.mxu0 0.0
    %950 = vmatpush1.msra.mxu0 0.0
    %951 = vmatprep.subr.mxu0 0.0
    %952 = vmatpush1.msra.mxu0 0.0
    %953 = vmatprep.subr.mxu0 0.0
    %954 = vmatpush1.msra.mxu0 0.0
    %955 = vmatprep.mubr.f32.mxu0 0.0
    %v956 = vand.u32 %v55, 4294901760
    %957 = vmatmul.mubr.f32.gmra.mrb[0].mxu0 %v956
    %v958 = vpop.f32.mrb[0].mxu0
    %v959 = vadd.f32 %v875, %v958
    %v960 = vpop.f32.mrb[0].mxu0
    %v961 = vadd.f32 %v877, %v960
    %962 = vdwg.mxu0
    %v963 = vand.u32 %v48, 4294901760
    %964 = vmatprep.subr.mxu0 %v963
    %v965 = vand.u32 %v47, 4294901760
    %966 = vmatpush1.msra.mxu0 %v965
    %v967 = vand.u32 %v52, 4294901760
    %968 = vmatprep.subr.mxu0 %v967
    %v969 = vand.u32 %v51, 4294901760
    %970 = vmatpush1.msra.mxu0 %v969
    %971 = vmatprep.subr.mxu0 0.0
    %972 = vmatpush1.msra.mxu0 0.0
    %973 = vmatprep.subr.mxu0 0.0
    %974 = vmatpush1.msra.mxu0 0.0
    %975 = vmatprep.subr.mxu0 0.0
    %976 = vmatpush1.msra.mxu0 0.0
    %977 = vmatprep.subr.mxu0 0.0
    %978 = vmatpush1.msra.mxu0 0.0
    %979 = vmatprep.subr.mxu0 0.0
    %980 = vmatpush1.msra.mxu0 0.0
    %981 = vmatprep.subr.mxu0 0.0
    %982 = vmatpush1.msra.mxu0 0.0
    %983 = vmatprep.subr.mxu0 0.0
    %984 = vmatpush1.msra.mxu0 0.0
    %985 = vmatprep.subr.mxu0 0.0
    %986 = vmatpush1.msra.mxu0 0.0
    %987 = vmatprep.subr.mxu0 0.0
    %988 = vmatpush1.msra.mxu0 0.0
    %989 = vmatprep.subr.mxu0 0.0
    %990 = vmatpush1.msra.mxu0 0.0
    %991 = vmatprep.subr.mxu0 0.0
    %992 = vmatpush1.msra.mxu0 0.0
    %993 = vmatprep.subr.mxu0 0.0
    %994 = vmatpush1.msra.mxu0 0.0
    %995 = vmatprep.subr.mxu0 0.0
    %996 = vmatpush1.msra.mxu0 0.0
    %997 = vmatprep.subr.mxu0 0.0
    %998 = vmatpush1.msra.mxu0 0.0
    %999 = vmatprep.subr.mxu0 0.0
    %1000 = vmatpush1.msra.mxu0 0.0
    %1001 = vmatprep.subr.mxu0 0.0
    %1002 = vmatpush1.msra.mxu0 0.0
    %1003 = vmatprep.subr.mxu0 0.0
    %1004 = vmatpush1.msra.mxu0 0.0
    %1005 = vmatprep.subr.mxu0 0.0
    %1006 = vmatpush1.msra.mxu0 0.0
    %1007 = vmatprep.subr.mxu0 0.0
    %1008 = vmatpush1.msra.mxu0 0.0
    %1009 = vmatprep.subr.mxu0 0.0
    %1010 = vmatpush1.msra.mxu0 0.0
    %1011 = vmatprep.subr.mxu0 0.0
    %1012 = vmatpush1.msra.mxu0 0.0
    %1013 = vmatprep.subr.mxu0 0.0
    %1014 = vmatpush1.msra.mxu0 0.0
    %1015 = vmatprep.subr.mxu0 0.0
    %1016 = vmatpush1.msra.mxu0 0.0
    %1017 = vmatprep.subr.mxu0 0.0
    %1018 = vmatpush1.msra.mxu0 0.0
    %1019 = vmatprep.subr.mxu0 0.0
    %1020 = vmatpush1.msra.mxu0 0.0
    %1021 = vmatprep.subr.mxu0 0.0
    %1022 = vmatpush1.msra.mxu0 0.0
    %1023 = vmatprep.subr.mxu0 0.0
    %1024 = vmatpush1.msra.mxu0 0.0
    %1025 = vmatprep.subr.mxu0 0.0
    %1026 = vmatpush1.msra.mxu0 0.0
    %1027 = vmatprep.subr.mxu0 0.0
    %1028 = vmatpush1.msra.mxu0 0.0
    %1029 = vmatprep.subr.mxu0 0.0
    %1030 = vmatpush1.msra.mxu0 0.0
    %1031 = vmatprep.mubr.f32.mxu0 0.0
    %v1032 = vand.u32 %v55, 4294901760
    %1033 = vmatmul.mubr.f32.gmra.mrb[0].mxu0 %v1032
    %v1034 = vpop.f32.mrb[0].mxu0
    %v1035 = vadd.f32 %v959, %v1034
    %v1036 = vpop.f32.mrb[0].mxu0
    %v1037 = vadd.f32 %v961, %v1036
    %1038 = vdwg.mxu0
    %v1039 = vld [vmem:[%s2] sm:$0xf]
    %v1041 = vlaneseq
    %v1042 = vshrl.u32 %v1041, 7
    %v1043 = vsub.s32 0, %v1042
    %v1044 = vrot.slane %v1039, %v1043
    %v1045 = vlaneseq
    %v1046 = vshrl.u32 %v1045, 7
    %v1047 = vsub.s32 1, %v1046
    %v1048 = vrot.slane %v1039, %v1047
    %v1049 = vlaneseq
    %v1050 = vshrl.u32 %v1049, 7
    %v1051 = vsub.s32 2, %v1050
    %v1052 = vrot.slane %v1039, %v1051
    %v1053 = vlaneseq
    %v1054 = vshrl.u32 %v1053, 7
    %v1055 = vsub.s32 3, %v1054
    %v1056 = vrot.slane %v1039, %v1055
    %v1061 = vmul.f32 %v544, %v1044
    %v1062 = vmul.f32 %v546, %v1048
    %v1063 = vmul.f32 %v1035, %v1052
    %v1064 = vmul.f32 %v1037, %v1056
    %v1065 = vld [vmem:[%s3] sm:$0xf]
    %v1067 = vlaneseq
    %v1068 = vshrl.u32 %v1067, 7
    %v1069 = vsub.s32 0, %v1068
    %v1070 = vrot.slane %v1065, %v1069
    %v1071 = vlaneseq
    %v1072 = vshrl.u32 %v1071, 7
    %v1073 = vsub.s32 1, %v1072
    %v1074 = vrot.slane %v1065, %v1073
    %v1075 = vlaneseq
    %v1076 = vshrl.u32 %v1075, 7
    %v1077 = vsub.s32 2, %v1076
    %v1078 = vrot.slane %v1065, %v1077
    %v1079 = vlaneseq
    %v1080 = vshrl.u32 %v1079, 7
    %v1081 = vsub.s32 3, %v1080
    %v1082 = vrot.slane %v1065, %v1081
    %v1087 = vadd.f32 %v1061, %v1070
    %v1088 = vadd.f32 %v1062, %v1074
    %v1089 = vadd.f32 %v1063, %v1078
    %v1090 = vadd.f32 %v1064, %v1082
    %v1091 = vand.u32 2147483647, %v1087
    %vm1092 = vcmp.le.f32.partialorder %v1091, 0.7853982
    %vm1093 = vcmp.lt.s32.totalorder %v1087, 0
    %v1094 = vand.u32 %v1087, 2139095040
    %v1095 = vshrl.u32 %v1094, 23
    %v1096 = vsub.s32 %v1095, 127
    %v1097 = vand.u32 2147483647, %v1087
    %v1098 = vand.u32 %v1097, 8388607
    %v1099 = vor.u32 %v1098, 8388608
    %v1100 = vsub.s32 0, %v1099
    %v1101 = vadd.s32 %v1096, 1
    %vm1102 = vcmp.gt.s32.totalorder %v1101, 0
    %v1103 = vsel %vm1102, %v1101, 0
    %v1104 = vshrl.u32 %v1103, 5
    %v1105 = vand.u32 %v1103, 31
    %v1106 = vsub.s32 32, %v1105
    %v1107 = vshrl.u32 683565275, %v1106
    %v1108 = vshll.u32 683565275, %v1105
    %v1109 = vshrl.u32 2475754826, %v1106
    %v1110 = vor.u32 %v1108, %v1109
    %v1111 = vshll.u32 2475754826, %v1105
    %v1112 = vshrl.u32 2131351028, %v1106
    %v1113 = vor.u32 %v1111, %v1112
    %v1114 = vshll.u32 2131351028, %v1105
    %v1115 = vshrl.u32 2102212464, %v1106
    %v1116 = vor.u32 %v1114, %v1115
    %v1117 = vshll.u32 2102212464, %v1105
    %v1118 = vshrl.u32 920167782, %v1106
    %v1119 = vor.u32 %v1117, %v1118
    %v1120 = vshll.u32 920167782, %v1105
    %v1121 = vshrl.u32 1326507024, %v1106
    %v1122 = vor.u32 %v1120, %v1121
    %vm1123 = vcmp.lt.s32.totalorder %v1104, 1
    %vm1124 = vcmp.lt.s32.totalorder %v1104, 2
    %vm1125 = vcmp.lt.s32.totalorder %v1104, 3
    %vm1126 = vcmp.lt.s32.totalorder %v1104, 4
    %v1127 = vsel %vm1123, %v1107, %v1110
    %v1128 = vsel %vm1126, %v1116, 2102212464
    %v1129 = vsel %vm1125, %v1113, %v1128
    %v1130 = vsel %vm1124, %v1127, %v1129
    %v1131 = vsel %vm1123, %v1110, %v1113
    %v1132 = vsel %vm1126, %v1119, 920167782
    %v1133 = vsel %vm1125, %v1116, %v1132
    %v1134 = vsel %vm1124, %v1131, %v1133
    %v1135 = vsel %vm1123, %v1113, %v1116
    %v1136 = vsel %vm1126, %v1122, 1326507024
    %v1137 = vsel %vm1125, %v1119, %v1136
    %v1138 = vsel %vm1124, %v1135, %v1137
    %v1139 = vshll.u32 %v1099, 8
    %v1140 = vmul.u32.u64.compose %v1139, %v1138
    %v1141 = vextract.low.u32 %v1140
    %v1142 = vextract.high.u32 %v1140
    %v1143 = vmul.u32.u64.compose %v1139, %v1134
    %v1144 = vextract.low.u32 %v1143
    %v1145 = vextract.high.u32 %v1143
    %v1146 = vmul.u32 %v1139, %v1130
    %v1147 = vadd.s32 %v1142, %v1144
    %vm1148 = vc.u32 %v1142, %v1144
    %v1149 = vadd.s32 %v1145, 1
    %v1150 = vsel %vm1148, %v1149, %v1145
    %v1151 = vadd.s32 %v1146, %v1150
    %v1152 = vadd.s32 %v1151, 536870912
    %v1153 = vshrl.u32 %v1152, 30
    %v1154 = vshll.u32 %v1153, 30
    %v1155 = vsub.s32 %v1151, %v1154
    %vm1156 = vcmp.lt.s32.totalorder %v1155, 0
    %v1157 = vsub.s32 0, %v1155
    %v1158 = vsel %vm1156, %v1157, %v1155
    %v1159 = vclz %v1158
    %v1160 = vsub.s32 %v1159, 2
    %vm1161 = vcmp.gt.s32.totalorder 0, %v1160
    %v1162 = vsel %vm1161, 0, %v1160
    %v1163 = vsub.s32 32, %v1162
    %v1164 = vshll.u32 %v1155, %v1162
    %v1165 = vshrl.u32 %v1147, %v1163
    %v1166 = vor.u32 %v1164, %v1165
    %v1167 = vsub.s32 4294967266, %v1162
    %v1168 = vadd.s32 %v1167, 127
    %v1169 = vshll.u32 %v1168, 23
    %v1170 = vor.u32 4788187, %v1169
    %v1171 = vand.u32 2147483647, %v1170
    %v1173 = vcvt.s32.f32 %v1166
    %v1174 = vmul.f32 %v1173, %v1171
    %v1175 = vxor.u32 %v1174, 2147483648
    %v1176 = vsel %vm1093, %v1175, %v1174
    %v1177 = vsub.s32 4, %v1153
    %v1178 = vsel %vm1093, %v1177, %v1153
    %v1179 = vsel %vm1092, %v1087, %v1176
    %v1180 = vsel %vm1092, 0, %v1178
    %v1181 = vcosq.f32.pop %v1179
    %v1182 = vsinq.f32.pop %v1179
    %vm1183 = vweird.f32 %v1087
    %v1184 = vand.u32 %v1180, 3
    %vm1185 = vcmp.lt.s32.totalorder %v1184, 2
    %vm1186 = vcmp.eq.s32.totalorder %v1184, 0
    %v1187 = vxor.u32 %v1182, 2147483648
    %v1188 = vsel %vm1186, %v1181, %v1187
    %vm1189 = vcmp.eq.s32.totalorder %v1184, 2
    %v1190 = vxor.u32 %v1181, 2147483648
    %v1191 = vsel %vm1189, %v1190, %v1182
    %v1192 = vsel %vm1185, %v1188, %v1191
    %v1193 = vsel %vm1183, nan, %v1192
    %v1194 = vand.u32 2147483647, %v1088
    %vm1195 = vcmp.le.f32.partialorder %v1194, 0.7853982
    %vm1196 = vcmp.lt.s32.totalorder %v1088, 0
    %v1197 = vand.u32 %v1088, 2139095040
    %v1198 = vshrl.u32 %v1197, 23
    %v1199 = vsub.s32 %v1198, 127
    %v1200 = vand.u32 2147483647, %v1088
    %v1201 = vand.u32 %v1200, 8388607
    %v1202 = vor.u32 %v1201, 8388608
    %v1203 = vsub.s32 0, %v1202
    %v1204 = vadd.s32 %v1199, 1
    %vm1205 = vcmp.gt.s32.totalorder %v1204, 0
    %v1206 = vsel %vm1205, %v1204, 0
    %v1207 = vshrl.u32 %v1206, 5
    %v1208 = vand.u32 %v1206, 31
    %v1209 = vsub.s32 32, %v1208
    %v1210 = vshrl.u32 683565275, %v1209
    %v1211 = vshll.u32 683565275, %v1208
    %v1212 = vshrl.u32 2475754826, %v1209
    %v1213 = vor.u32 %v1211, %v1212
    %v1214 = vshll.u32 2475754826, %v1208
    %v1215 = vshrl.u32 2131351028, %v1209
    %v1216 = vor.u32 %v1214, %v1215
    %v1217 = vshll.u32 2131351028, %v1208
    %v1218 = vshrl.u32 2102212464, %v1209
    %v1219 = vor.u32 %v1217, %v1218
    %v1220 = vshll.u32 2102212464, %v1208
    %v1221 = vshrl.u32 920167782, %v1209
    %v1222 = vor.u32 %v1220, %v1221
    %v1223 = vshll.u32 920167782, %v1208
    %v1224 = vshrl.u32 1326507024, %v1209
    %v1225 = vor.u32 %v1223, %v1224
    %vm1226 = vcmp.lt.s32.totalorder %v1207, 1
    %vm1227 = vcmp.lt.s32.totalorder %v1207, 2
    %vm1228 = vcmp.lt.s32.totalorder %v1207, 3
    %vm1229 = vcmp.lt.s32.totalorder %v1207, 4
    %v1230 = vsel %vm1226, %v1210, %v1213
    %v1231 = vsel %vm1229, %v1219, 2102212464
    %v1232 = vsel %vm1228, %v1216, %v1231
    %v1233 = vsel %vm1227, %v1230, %v1232
    %v1234 = vsel %vm1226, %v1213, %v1216
    %v1235 = vsel %vm1229, %v1222, 920167782
    %v1236 = vsel %vm1228, %v1219, %v1235
    %v1237 = vsel %vm1227, %v1234, %v1236
    %v1238 = vsel %vm1226, %v1216, %v1219
    %v1239 = vsel %vm1229, %v1225, 1326507024
    %v1240 = vsel %vm1228, %v1222, %v1239
    %v1241 = vsel %vm1227, %v1238, %v1240
    %v1242 = vshll.u32 %v1202, 8
    %v1243 = vmul.u32.u64.compose %v1242, %v1241
    %v1244 = vextract.low.u32 %v1243
    %v1245 = vextract.high.u32 %v1243
    %v1246 = vmul.u32.u64.compose %v1242, %v1237
    %v1247 = vextract.low.u32 %v1246
    %v1248 = vextract.high.u32 %v1246
    %v1249 = vmul.u32 %v1242, %v1233
    %v1250 = vadd.s32 %v1245, %v1247
    %vm1251 = vc.u32 %v1245, %v1247
    %v1252 = vadd.s32 %v1248, 1
    %v1253 = vsel %vm1251, %v1252, %v1248
    %v1254 = vadd.s32 %v1249, %v1253
    %v1255 = vadd.s32 %v1254, 536870912
    %v1256 = vshrl.u32 %v1255, 30
    %v1257 = vshll.u32 %v1256, 30
    %v1258 = vsub.s32 %v1254, %v1257
    %vm1259 = vcmp.lt.s32.totalorder %v1258, 0
    %v1260 = vsub.s32 0, %v1258
    %v1261 = vsel %vm1259, %v1260, %v1258
    %v1262 = vclz %v1261
    %v1263 = vsub.s32 %v1262, 2
    %vm1264 = vcmp.gt.s32.totalorder 0, %v1263
    %v1265 = vsel %vm1264, 0, %v1263
    %v1266 = vsub.s32 32, %v1265
    %v1267 = vshll.u32 %v1258, %v1265
    %v1268 = vshrl.u32 %v1250, %v1266
    %v1269 = vor.u32 %v1267, %v1268
    %v1270 = vsub.s32 4294967266, %v1265
    %v1271 = vadd.s32 %v1270, 127
    %v1272 = vshll.u32 %v1271, 23
    %v1273 = vor.u32 4788187, %v1272
    %v1274 = vand.u32 2147483647, %v1273
    %v1276 = vcvt.s32.f32 %v1269
    %v1277 = vmul.f32 %v1276, %v1274
    %v1278 = vxor.u32 %v1277, 2147483648
    %v1279 = vsel %vm1196, %v1278, %v1277
    %v1280 = vsub.s32 4, %v1256
    %v1281 = vsel %vm1196, %v1280, %v1256
    %v1282 = vsel %vm1195, %v1088, %v1279
    %v1283 = vsel %vm1195, 0, %v1281
    %v1284 = vcosq.f32.pop %v1282
    %v1285 = vsinq.f32.pop %v1282
    %vm1286 = vweird.f32 %v1088
    %v1287 = vand.u32 %v1283, 3
    %vm1288 = vcmp.lt.s32.totalorder %v1287, 2
    %vm1289 = vcmp.eq.s32.totalorder %v1287, 0
    %v1290 = vxor.u32 %v1285, 2147483648
    %v1291 = vsel %vm1289, %v1284, %v1290
    %vm1292 = vcmp.eq.s32.totalorder %v1287, 2
    %v1293 = vxor.u32 %v1284, 2147483648
    %v1294 = vsel %vm1292, %v1293, %v1285
    %v1295 = vsel %vm1288, %v1291, %v1294
    %v1296 = vsel %vm1286, nan, %v1295
    %v1297 = vand.u32 2147483647, %v1089
    %vm1298 = vcmp.le.f32.partialorder %v1297, 0.7853982
    %vm1299 = vcmp.lt.s32.totalorder %v1089, 0
    %v1300 = vand.u32 %v1089, 2139095040
    %v1301 = vshrl.u32 %v1300, 23
    %v1302 = vsub.s32 %v1301, 127
    %v1303 = vand.u32 2147483647, %v1089
    %v1304 = vand.u32 %v1303, 8388607
    %v1305 = vor.u32 %v1304, 8388608
    %v1306 = vsub.s32 0, %v1305
    %v1307 = vadd.s32 %v1302, 1
    %vm1308 = vcmp.gt.s32.totalorder %v1307, 0
    %v1309 = vsel %vm1308, %v1307, 0
    %v1310 = vshrl.u32 %v1309, 5
    %v1311 = vand.u32 %v1309, 31
    %v1312 = vsub.s32 32, %v1311
    %v1313 = vshrl.u32 683565275, %v1312
    %v1314 = vshll.u32 683565275, %v1311
    %v1315 = vshrl.u32 2475754826, %v1312
    %v1316 = vor.u32 %v1314, %v1315
    %v1317 = vshll.u32 2475754826, %v1311
    %v1318 = vshrl.u32 2131351028, %v1312
    %v1319 = vor.u32 %v1317, %v1318
    %v1320 = vshll.u32 2131351028, %v1311
    %v1321 = vshrl.u32 2102212464, %v1312
    %v1322 = vor.u32 %v1320, %v1321
    %v1323 = vshll.u32 2102212464, %v1311
    %v1324 = vshrl.u32 920167782, %v1312
    %v1325 = vor.u32 %v1323, %v1324
    %v1326 = vshll.u32 920167782, %v1311
    %v1327 = vshrl.u32 1326507024, %v1312
    %v1328 = vor.u32 %v1326, %v1327
    %vm1329 = vcmp.lt.s32.totalorder %v1310, 1
    %vm1330 = vcmp.lt.s32.totalorder %v1310, 2
    %vm1331 = vcmp.lt.s32.totalorder %v1310, 3
    %vm1332 = vcmp.lt.s32.totalorder %v1310, 4
    %v1333 = vsel %vm1329, %v1313, %v1316
    %v1334 = vsel %vm1332, %v1322, 2102212464
    %v1335 = vsel %vm1331, %v1319, %v1334
    %v1336 = vsel %vm1330, %v1333, %v1335
    %v1337 = vsel %vm1329, %v1316, %v1319
    %v1338 = vsel %vm1332, %v1325, 920167782
    %v1339 = vsel %vm1331, %v1322, %v1338
    %v1340 = vsel %vm1330, %v1337, %v1339
    %v1341 = vsel %vm1329, %v1319, %v1322
    %v1342 = vsel %vm1332, %v1328, 1326507024
    %v1343 = vsel %vm1331, %v1325, %v1342
    %v1344 = vsel %vm1330, %v1341, %v1343
    %v1345 = vshll.u32 %v1305, 8
    %v1346 = vmul.u32.u64.compose %v1345, %v1344
    %v1347 = vextract.low.u32 %v1346
    %v1348 = vextract.high.u32 %v1346
    %v1349 = vmul.u32.u64.compose %v1345, %v1340
    %v1350 = vextract.low.u32 %v1349
    %v1351 = vextract.high.u32 %v1349
    %v1352 = vmul.u32 %v1345, %v1336
    %v1353 = vadd.s32 %v1348, %v1350
    %vm1354 = vc.u32 %v1348, %v1350
    %v1355 = vadd.s32 %v1351, 1
    %v1356 = vsel %vm1354, %v1355, %v1351
    %v1357 = vadd.s32 %v1352, %v1356
    %v1358 = vadd.s32 %v1357, 536870912
    %v1359 = vshrl.u32 %v1358, 30
    %v1360 = vshll.u32 %v1359, 30
    %v1361 = vsub.s32 %v1357, %v1360
    %vm1362 = vcmp.lt.s32.totalorder %v1361, 0
    %v1363 = vsub.s32 0, %v1361
    %v1364 = vsel %vm1362, %v1363, %v1361
    %v1365 = vclz %v1364
    %v1366 = vsub.s32 %v1365, 2
    %vm1367 = vcmp.gt.s32.totalorder 0, %v1366
    %v1368 = vsel %vm1367, 0, %v1366
    %v1369 = vsub.s32 32, %v1368
    %v1370 = vshll.u32 %v1361, %v1368
    %v1371 = vshrl.u32 %v1353, %v1369
    %v1372 = vor.u32 %v1370, %v1371
    %v1373 = vsub.s32 4294967266, %v1368
    %v1374 = vadd.s32 %v1373, 127
    %v1375 = vshll.u32 %v1374, 23
    %v1376 = vor.u32 4788187, %v1375
    %v1377 = vand.u32 2147483647, %v1376
    %v1379 = vcvt.s32.f32 %v1372
    %v1380 = vmul.f32 %v1379, %v1377
    %v1381 = vxor.u32 %v1380, 2147483648
    %v1382 = vsel %vm1299, %v1381, %v1380
    %v1383 = vsub.s32 4, %v1359
    %v1384 = vsel %vm1299, %v1383, %v1359
    %v1385 = vsel %vm1298, %v1089, %v1382
    %v1386 = vsel %vm1298, 0, %v1384
    %v1387 = vcosq.f32.pop %v1385
    %v1388 = vsinq.f32.pop %v1385
    %vm1389 = vweird.f32 %v1089
    %v1390 = vand.u32 %v1386, 3
    %vm1391 = vcmp.lt.s32.totalorder %v1390, 2
    %vm1392 = vcmp.eq.s32.totalorder %v1390, 0
    %v1393 = vxor.u32 %v1388, 2147483648
    %v1394 = vsel %vm1392, %v1387, %v1393
    %vm1395 = vcmp.eq.s32.totalorder %v1390, 2
    %v1396 = vxor.u32 %v1387, 2147483648
    %v1397 = vsel %vm1395, %v1396, %v1388
    %v1398 = vsel %vm1391, %v1394, %v1397
    %v1399 = vsel %vm1389, nan, %v1398
    %v1400 = vand.u32 2147483647, %v1090
    %vm1401 = vcmp.le.f32.partialorder %v1400, 0.7853982
    %vm1402 = vcmp.lt.s32.totalorder %v1090, 0
    %v1403 = vand.u32 %v1090, 2139095040
    %v1404 = vshrl.u32 %v1403, 23
    %v1405 = vsub.s32 %v1404, 127
    %v1406 = vand.u32 2147483647, %v1090
    %v1407 = vand.u32 %v1406, 8388607
    %v1408 = vor.u32 %v1407, 8388608
    %v1409 = vsub.s32 0, %v1408
    %v1410 = vadd.s32 %v1405, 1
    %vm1411 = vcmp.gt.s32.totalorder %v1410, 0
    %v1412 = vsel %vm1411, %v1410, 0
    %v1413 = vshrl.u32 %v1412, 5
    %v1414 = vand.u32 %v1412, 31
    %v1415 = vsub.s32 32, %v1414
    %v1416 = vshrl.u32 683565275, %v1415
    %v1417 = vshll.u32 683565275, %v1414
    %v1418 = vshrl.u32 2475754826, %v1415
    %v1419 = vor.u32 %v1417, %v1418
    %v1420 = vshll.u32 2475754826, %v1414
    %v1421 = vshrl.u32 2131351028, %v1415
    %v1422 = vor.u32 %v1420, %v1421
    %v1423 = vshll.u32 2131351028, %v1414
    %v1424 = vshrl.u32 2102212464, %v1415
    %v1425 = vor.u32 %v1423, %v1424
    %v1426 = vshll.u32 2102212464, %v1414
    %v1427 = vshrl.u32 920167782, %v1415
    %v1428 = vor.u32 %v1426, %v1427
    %v1429 = vshll.u32 920167782, %v1414
    %v1430 = vshrl.u32 1326507024, %v1415
    %v1431 = vor.u32 %v1429, %v1430
    %vm1432 = vcmp.lt.s32.totalorder %v1413, 1
    %vm1433 = vcmp.lt.s32.totalorder %v1413, 2
    %vm1434 = vcmp.lt.s32.totalorder %v1413, 3
    %vm1435 = vcmp.lt.s32.totalorder %v1413, 4
    %v1436 = vsel %vm1432, %v1416, %v1419
    %v1437 = vsel %vm1435, %v1425, 2102212464
    %v1438 = vsel %vm1434, %v1422, %v1437
    %v1439 = vsel %vm1433, %v1436, %v1438
    %v1440 = vsel %vm1432, %v1419, %v1422
    %v1441 = vsel %vm1435, %v1428, 920167782
    %v1442 = vsel %vm1434, %v1425, %v1441
    %v1443 = vsel %vm1433, %v1440, %v1442
    %v1444 = vsel %vm1432, %v1422, %v1425
    %v1445 = vsel %vm1435, %v1431, 1326507024
    %v1446 = vsel %vm1434, %v1428, %v1445
    %v1447 = vsel %vm1433, %v1444, %v1446
    %v1448 = vshll.u32 %v1408, 8
    %v1449 = vmul.u32.u64.compose %v1448, %v1447
    %v1450 = vextract.low.u32 %v1449
    %v1451 = vextract.high.u32 %v1449
    %v1452 = vmul.u32.u64.compose %v1448, %v1443
    %v1453 = vextract.low.u32 %v1452
    %v1454 = vextract.high.u32 %v1452
    %v1455 = vmul.u32 %v1448, %v1439
    %v1456 = vadd.s32 %v1451, %v1453
    %vm1457 = vc.u32 %v1451, %v1453
    %v1458 = vadd.s32 %v1454, 1
    %v1459 = vsel %vm1457, %v1458, %v1454
    %v1460 = vadd.s32 %v1455, %v1459
    %v1461 = vadd.s32 %v1460, 536870912
    %v1462 = vshrl.u32 %v1461, 30
    %v1463 = vshll.u32 %v1462, 30
    %v1464 = vsub.s32 %v1460, %v1463
    %vm1465 = vcmp.lt.s32.totalorder %v1464, 0
    %v1466 = vsub.s32 0, %v1464
    %v1467 = vsel %vm1465, %v1466, %v1464
    %v1468 = vclz %v1467
    %v1469 = vsub.s32 %v1468, 2
    %vm1470 = vcmp.gt.s32.totalorder 0, %v1469
    %v1471 = vsel %vm1470, 0, %v1469
    %v1472 = vsub.s32 32, %v1471
    %v1473 = vshll.u32 %v1464, %v1471
    %v1474 = vshrl.u32 %v1456, %v1472
    %v1475 = vor.u32 %v1473, %v1474
    %v1476 = vsub.s32 4294967266, %v1471
    %v1477 = vadd.s32 %v1476, 127
    %v1478 = vshll.u32 %v1477, 23
    %v1479 = vor.u32 4788187, %v1478
    %v1480 = vand.u32 2147483647, %v1479
    %v1482 = vcvt.s32.f32 %v1475
    %v1483 = vmul.f32 %v1482, %v1480
    %v1484 = vxor.u32 %v1483, 2147483648
    %v1485 = vsel %vm1402, %v1484, %v1483
    %v1486 = vsub.s32 4, %v1462
    %v1487 = vsel %vm1402, %v1486, %v1462
    %v1488 = vsel %vm1401, %v1090, %v1485
    %v1489 = vsel %vm1401, 0, %v1487
    %v1490 = vcosq.f32.pop %v1488
    %v1491 = vsinq.f32.pop %v1488
    %vm1492 = vweird.f32 %v1090
    %v1493 = vand.u32 %v1489, 3
    %vm1494 = vcmp.lt.s32.totalorder %v1493, 2
    %vm1495 = vcmp.eq.s32.totalorder %v1493, 0
    %v1496 = vxor.u32 %v1491, 2147483648
    %v1497 = vsel %vm1495, %v1490, %v1496
    %vm1498 = vcmp.eq.s32.totalorder %v1493, 2
    %v1499 = vxor.u32 %v1490, 2147483648
    %v1500 = vsel %vm1498, %v1499, %v1491
    %v1501 = vsel %vm1494, %v1497, %v1500
    %v1502 = vsel %vm1492, nan, %v1501
    %v1503 = vmul.f32 %v1193, 0.17677669
    %v1504 = vmul.f32 %v1296, 0.17677669
    %v1505 = vmul.f32 %v1399, 0.17677669
    %v1506 = vmul.f32 %v1502, 0.17677669
    %v1511 = vcombine.low %v1503, %v1504
    %v1512 = vcombine.low %v1505, %v1506
    %v1514 = vunpack.c.l.s4 1966171168
    %v1515 = vunpack.c.0.s8 %v1514
    %v1516 = vlaneseq
    %v1517 = vshrl.u32 %v1516, 7
    %v1518 = vsub.s32 %v1515, %v1517
    %v1519 = vrot.slane %v1511, %v1518
    %v1521 = vunpack.c.l.s4 1966171168
    %v1522 = vunpack.c.0.s8 %v1521
    %v1523 = vlaneseq
    %v1524 = vshrl.u32 %v1523, 7
    %v1525 = vsub.s32 %v1522, %v1524
    %v1526 = vrot.slane %v1512, %v1525
    %v1527 = vcombine.low %v1519, %v1526
    %v1529 = vunpack.c.l.s4 1966171168
    %v1530 = vunpack.c.0.s8 %v1529
    %v1531 = vlaneseq
    %v1532 = vshrl.u32 %v1531, 7
    %v1533 = vsub.s32 %v1530, %v1532
    %v1534 = vrot.slane %v1527, %v1533
    %v1536 = vlaneseq
    %vm1537 = vcmp.ge.s32.totalorder %v1536, 0
    %vm1538 = vcmp.lt.s32.totalorder %v1536, 512
    %vm1539 = vmand %vm1537, %vm1538
    %1540 = vst.msk [vmem:[#allocation7] sm:$0xf] %vm1539, %v1534
    // Predicated region
    $region26: #{tpu_custom_call.1} parent=1 // pred_check
      _
    $region27: #{tpu_custom_call.1} parent=1 // pred_check_branch
      %1542 = sbr.rel (0) target = $region29
    $region28: #{tpu_custom_call.1} parent=1 // pred_region
      %s1544 = ssub.s32 64, 64
      %1545 = vsyncadd [#allocation4], %s1544
      %s1547 = sshll.u32 [#allocation7], 4
      %s1548 = int_to_ptr.vmem [resolvable:$true] %s1547
      %1550 = dma.vmem_to_hbm [thread:$0]  %s1548, 64, %s4, [#allocation4]
    $region29: #{tpu_custom_call.1} parent=1 // pred_fallthru
      _
    // Predicated region
    $region30: #{tpu_custom_call.1} parent=1 // pred_check
      _
    $region31: #{tpu_custom_call.1} parent=1 // pred_check_branch
      %1552 = sbr.rel (0) target = $region33
    $region32: #{tpu_custom_call.1} parent=1 // pred_region
      %1553 = dma.done [#allocation4], 64
    $region33: #{tpu_custom_call.1} parent=1 // pred_fallthru
      _
    %1554 = vsyncpa [#allocation3], 1
    %1555 = vsyncpa [#allocation6], 1
    %1556 = vsyncpa [#allocation4], 1

</llo_original>
